<compile_context>
chip_gen: v7x
topology: tpu7x:2x2x1
jax: 0.10.0
libtpu: 0.0.40
codegen_flags: <defaults>
</compile_context>

<pallas_src>
import jax
import jax.numpy as jnp
import numpy as np
from jax import lax
from jax.experimental import pallas as pl
from jax.experimental.pallas import tpu as pltpu

# ---------------- hyper-parameters ----------------
INPUT_SIZE = 4        # C
HIDDEN = 32           # H
N_NODES = 16          # N
BATCH = 2             # B
STEPS = 8             # T
ORDER = 2             # GCGRU "kernel_size" (diffusion order)
SUPPORT_LEN = 2
RNN_IN = 2 * INPUT_SIZE                          # [x_s, m_s] (u_size = 0)
GATE_IN = RNN_IN + HIDDEN                        # GCGRU gate conv input channels (40)
GATE_CAT = (SUPPORT_LEN * ORDER + 1) * GATE_IN   # include_self=True -> 200
DEC_IN = RNN_IN + HIDDEN                         # spatial decoder lin_in channels (40)


# ---------------- the kernel (whole sequence in one invocation) ----------------
def gril_kernel(xm_ref, acat_ref,
                wfs_ref, bfs_ref, wli_ref, bli_ref, wgc_ref, bgc_ref,
                wlo_ref, blo_ref, wro_ref, bro_ref, alpha_ref,
                wru_ref, bru_ref, wc_ref, bc_ref,
                ip_ref, rep_ref, st_ref, h_ref):
    T, _, BN = xm_ref.shape
    C = wfs_ref.shape[0]
    H = h_ref.shape[0]

    def mm(w_ref, act):
        # bf16 x bf16 MXU matmul with f32 accumulation; weight read at use site.
        return jnp.dot(w_ref[...], act.astype(jnp.bfloat16),
                       preferred_element_type=jnp.float32)

    def diffuse(act):
        # One lane-dense (R, BN) @ (BN, 4*BN) matmul computes all four graph
        # diffusions [z A0^T | z (A0^2)^T | z A1^T | z (A1^2)^T] at once.
        return jnp.dot(act.astype(jnp.bfloat16), acat_ref[...],
                       preferred_element_type=jnp.float32)

    def unfold(zA):
        # (R, 4*BN) lane-concatenated -> (4R, BN) sublane-stacked (XLU relayout).
        return jnp.concatenate(
            [zA[:, k * BN:(k + 1) * BN] for k in range(4)], axis=0)

    # get_h0 with n_nodes=None -> zeros
    h_ref[...] = jnp.zeros_like(h_ref)

    def step(t, carry):
        h = h_ref[...]                              # (H, BN) f32
        xm = xm_ref[t]                              # (2C, BN): [x_s ; m_s]
        x_s, m_s = xm[:C], xm[C:]
        obs = m_s > 0.0

        # ---- first-stage imputation ----
        xh1 = mm(wfs_ref, h) + bfs_ref[...]         # (C, BN)
        xf = jnp.where(obs, x_s, xh1)

        # ---- spatial decoder ----
        v1 = jnp.concatenate([xf, m_s, h], axis=0)            # (2C+H, BN)
        x_in = mm(wli_ref, v1) + bli_ref[...]                 # (H, BN)
        xA = diffuse(x_in)                                    # (H, 4*BN)
        gcat = jnp.concatenate([xA[:, 0:BN], xA[:, 2 * BN:3 * BN]], axis=0)  # [A0 | A1]
        out = mm(wgc_ref, gcat) + bgc_ref[...]
        out = mm(wlo_ref, jnp.concatenate([out, h], axis=0)) + blo_ref[...]
        out = jnp.where(out >= 0.0, out, alpha_ref[0] * out)  # PReLU
        rep = jnp.concatenate([out, h], axis=0)               # (2H, BN)
        xh2 = mm(wro_ref, rep) + bro_ref[...]                 # (C, BN)
        xf2 = jnp.where(obs, xf, xh2)

        # ---- GCGRU cell (supports [self, A0, A0^2, A1, A1^2]) ----
        v2 = jnp.concatenate([xf2, m_s, h], axis=0)           # (2C+H, BN)
        stack = jnp.concatenate([v2, unfold(diffuse(v2))], axis=0)   # (5*(2C+H), BN)
        ru = jax.nn.sigmoid(mm(wru_ref, stack) + bru_ref[...])       # fused r|u gates
        r, u = ru[:H], ru[H:]
        vc = jnp.concatenate([xf2, m_s, r * h], axis=0)
        stack_c = jnp.concatenate([vc, unfold(diffuse(vc))], axis=0)
        c = jnp.tanh(mm(wc_ref, stack_c) + bc_ref[...])
        h_new = u * h + (1.0 - u) * c

        ip_ref[t] = jnp.concatenate([xh2, xh1], axis=0)       # [imputation ; prediction]
        rep_ref[t] = rep
        st_ref[t] = h_new
        h_ref[...] = h_new
        return carry

    lax.fori_loop(0, T, step, 0)


# ---------------- wrapper ----------------
def gril_forward(x, mask, supports, params):
    """x, mask: (B, C, N, T) float32; supports: (2, N, N)."""
    B, C, N, T = x.shape
    H = params['wli'].shape[0]
    BN = B * N

    # pack [x ; m] into one full-tile (T, 2C, BN) array, channel x (batch*node)
    xm_t = (jnp.concatenate([x, mask], axis=1)
            .transpose(3, 1, 0, 2).reshape(T, 2 * C, BN).astype(jnp.float32))

    # lane-concatenated block-diagonal transposed adjacency powers:
    # A_cat = [A0^T | (A0^2)^T | A1^T | (A1^2)^T], per-batch block diagonal.
    a0, a1 = supports[0], supports[1]
    eye_b = jnp.eye(B, dtype=jnp.float32)
    a_cat = jnp.concatenate(
        [jnp.kron(eye_b, a0.T), jnp.kron(eye_b, (a0 @ a0).T),
         jnp.kron(eye_b, a1.T), jnp.kron(eye_b, (a1 @ a1).T)], axis=1)  # (BN, 4*BN)

    bf16 = lambda w: w.astype(jnp.bfloat16)
    # fuse r and u gates along the output dim (original column layout kept)
    wru = jnp.concatenate([params['wr'], params['wu']], axis=0)
    bru = jnp.concatenate([params['br'], params['bu']], axis=0)

    args, in_specs = [], []

    def add(a, smem=False):
        args.append(a)
        space = pltpu.MemorySpace.SMEM if smem else pltpu.MemorySpace.VMEM
        in_specs.append(pl.BlockSpec(memory_space=space))

    add(xm_t); add(bf16(a_cat))
    add(bf16(params['wfs'])); add(params['bfs'])
    add(bf16(params['wli'])); add(params['bli'])
    add(bf16(params['wgc'])); add(params['bgc'])
    add(bf16(params['wlo'])); add(params['blo'])
    add(bf16(params['wro'])); add(params['bro'])
    add(params['alpha'], smem=True)              # PReLU alpha scalar
    add(bf16(wru)); add(bru)
    add(bf16(params['wc'])); add(params['bc'])

    out_shape = (
        jax.ShapeDtypeStruct((T, 2 * C, BN), jnp.float32),   # [imputations ; predictions]
        jax.ShapeDtypeStruct((T, 2 * H, BN), jnp.float32),   # representations
        jax.ShapeDtypeStruct((T, H, BN), jnp.float32),       # states (n_layers = 1)
    )
    vmem_spec = pl.BlockSpec(memory_space=pltpu.MemorySpace.VMEM)

    ip, rep, st = pl.pallas_call(
        gril_kernel,
        out_shape=out_shape,
        in_specs=in_specs,
        out_specs=(vmem_spec, vmem_spec, vmem_spec),
        scratch_shapes=[pltpu.VMEM((H, BN), jnp.float32)],   # hidden state
    )(*args)

    def unflat(z):   # (T, R, B*N) -> (B, R, N, T)
        return z.reshape(T, z.shape[1], B, N).transpose(2, 1, 3, 0)

    ip_u = unflat(ip)                 # (B, 2C, N, T)
    return (ip_u[:, :C],              # imputations  (B, C, N, T)
            ip_u[:, C:],              # predictions  (B, C, N, T)
            unflat(rep),              # representations (B, 2H, N, T)
            unflat(st)[None])         # states (1, B, H, N, T)


# ---------------- pure-JAX reference (for validation only) ----------------
def gril_reference(x, mask, supports, params):
    B, C, N, T = x.shape
    H = HIDDEN
    hp = jax.lax.Precision.HIGHEST

    def conv(W, b, z):
        return jnp.einsum('oi,bin->bon', W, z, precision=hp) + b

    def gm(A, z):
        return jnp.einsum('wv,bcv->bcw', A, z, precision=hp)

    h = jnp.zeros((B, H, N), jnp.float32)
    imps, preds, reps, sts = [], [], [], []
    for t in range(T):
        x_s, m_s = x[..., t], mask[..., t]
        xh1 = conv(params['wfs'], params['bfs'], h)
        x_f = jnp.where(m_s > 0, x_s, xh1)
        x_in = conv(params['wli'], params['bli'],
                    jnp.concatenate([x_f, m_s, h], axis=1))
        g = jnp.concatenate([gm(supports[0], x_in), gm(supports[1], x_in)], axis=1)
        out = conv(params['wgc'], params['bgc'], g)
        out = conv(params['wlo'], params['blo'], jnp.concatenate([out, h], axis=1))
        a = params['alpha'][0]
        out = jnp.where(out >= 0, out, a * out)
        rep = jnp.concatenate([out, h], axis=1)
        xh2 = conv(params['wro'], params['bro'], rep)
        x_f2 = jnp.where(m_s > 0, x_f, xh2)
        inp = jnp.concatenate([x_f2, m_s], axis=1)

        def scat(z):
            z0 = gm(supports[0], z); z00 = gm(supports[0], z0)
            z1 = gm(supports[1], z); z11 = gm(supports[1], z1)
            return jnp.concatenate([z, z0, z00, z1, z11], axis=1)

        xg = scat(jnp.concatenate([inp, h], axis=1))
        r = jax.nn.sigmoid(conv(params['wr'], params['br'], xg))
        u = jax.nn.sigmoid(conv(params['wu'], params['bu'], xg))
        xc = scat(jnp.concatenate([inp, r * h], axis=1))
        c = jnp.tanh(conv(params['wc'], params['bc'], xc))
        h = u * h + (1.0 - u) * c
        imps.append(xh2); preds.append(xh1); reps.append(rep); sts.append(h[None])
    return (jnp.stack(imps, -1), jnp.stack(preds, -1),
            jnp.stack(reps, -1), jnp.stack(sts, -1))


# ---------------- main ----------------
if __name__ == "__main__":
    key = jax.random.PRNGKey(0)
    ks = jax.random.split(key, 32)
    B, C, N, H, T = BATCH, INPUT_SIZE, N_NODES, HIDDEN, STEPS

    def winit(k, o, i):
        return jax.random.normal(k, (o, i), dtype=jnp.float32) / np.sqrt(float(i))

    def binit(k, o):
        return 0.1 * jax.random.normal(k, (o, 1), dtype=jnp.float32)

    params = dict(
        wfs=winit(ks[0], C, H),        bfs=binit(ks[1], C),
        wli=winit(ks[2], H, DEC_IN),   bli=binit(ks[3], H),
        wgc=winit(ks[4], H, 2 * H),    bgc=binit(ks[5], H),
        wlo=winit(ks[6], H, 2 * H),    blo=binit(ks[7], H),
        wro=winit(ks[8], C, 2 * H),    bro=binit(ks[9], C),
        alpha=jnp.full((1,), 0.25, dtype=jnp.float32),    # nn.PReLU default init
        wr=winit(ks[10], H, GATE_CAT), br=binit(ks[11], H),
        wu=winit(ks[12], H, GATE_CAT), bu=binit(ks[13], H),
        wc=winit(ks[14], H, GATE_CAT), bc=binit(ks[15], H),
    )

    x = jax.random.normal(ks[20], (B, C, N, T), dtype=jnp.float32)
    mask = (jax.random.uniform(ks[21], (B, C, N, T)) > 0.2).astype(jnp.float32)

    adj = jax.random.uniform(ks[22], (N, N), dtype=jnp.float32) * (1.0 - jnp.eye(N))
    a_fwd = adj / (adj.sum(1, keepdims=True) + 1e-10)
    a_bwd = adj.T / (adj.T.sum(1, keepdims=True) + 1e-10)
    supports = jnp.stack([a_fwd, a_bwd])          # (2, N, N), as the torch model gets

    outs = jax.jit(gril_forward)(x, mask, supports, params)
    outs = jax.block_until_ready(outs)

    refs = gril_reference(x, mask, supports, params)
    # Kernel runs bf16 MXU operands with f32 accumulation over an 8-step
    # recurrence; reference is full-f32 HIGHEST precision, so allow a slightly
    # wider absolute floor than a pure-f32 kernel would need.
    for o, r in zip(outs, refs):
        np.testing.assert_allclose(np.asarray(o), np.asarray(r), rtol=5e-2, atol=1e-1)

    print("KERNEL_OK")
</pallas_src>

<mosaic_0001>
module attributes {stable_mosaic.version = 11 : i64} {
  func.func @gril_kernel(%arg0: memref<8x8x32xf32, #tpu.memory_space<vmem>>, %arg1: memref<32x128xbf16, #tpu.memory_space<vmem>>, %arg2: memref<4x32xbf16, #tpu.memory_space<vmem>>, %arg3: memref<4x1xf32, #tpu.memory_space<vmem>>, %arg4: memref<32x40xbf16, #tpu.memory_space<vmem>>, %arg5: memref<32x1xf32, #tpu.memory_space<vmem>>, %arg6: memref<32x64xbf16, #tpu.memory_space<vmem>>, %arg7: memref<32x1xf32, #tpu.memory_space<vmem>>, %arg8: memref<32x64xbf16, #tpu.memory_space<vmem>>, %arg9: memref<32x1xf32, #tpu.memory_space<vmem>>, %arg10: memref<4x64xbf16, #tpu.memory_space<vmem>>, %arg11: memref<4x1xf32, #tpu.memory_space<vmem>>, %arg12: memref<1xf32, #tpu.memory_space<smem>>, %arg13: memref<64x200xbf16, #tpu.memory_space<vmem>>, %arg14: memref<64x1xf32, #tpu.memory_space<vmem>>, %arg15: memref<32x200xbf16, #tpu.memory_space<vmem>>, %arg16: memref<32x1xf32, #tpu.memory_space<vmem>>, %arg17: memref<8x8x32xf32, #tpu.memory_space<vmem>>, %arg18: memref<8x64x32xf32, #tpu.memory_space<vmem>>, %arg19: memref<8x32x32xf32, #tpu.memory_space<vmem>>, %arg20: memref<32x32xf32, #tpu.memory_space<vmem>>) attributes {dimension_semantics = [], scalar_prefetch = 0 : i64, scratch_operands = 1 : i64, tpu.core_type = #tpu.core_type<tc>} {
    %cst = arith.constant 0.000000e+00 : f32
    %0 = vector.broadcast %cst : f32 to vector<32x32xf32>
    %c0 = arith.constant 0 : index
    %c0_0 = arith.constant 0 : index
    %1 = vector.load %arg20[%c0, %c0_0] : memref<32x32xf32, #tpu.memory_space<vmem>>, vector<32x32xf32>
    tpu.vector_store %arg20[%c0, %c0_0], %0 {strides = array<i32>} : memref<32x32xf32, #tpu.memory_space<vmem>>, vector<32x32xf32>,
    %c0_i32 = arith.constant 0 : i32
    %c8_i32 = arith.constant 8 : i32
    %2 = arith.addi %c0_i32, %c8_i32 : i32
    %c1_i32 = arith.constant 1 : i32
    scf.for %arg21 = %c0_i32 to %2 step %c1_i32  : i32 {
      %c0_2 = arith.constant 0 : index
      %c0_3 = arith.constant 0 : index
      %3 = vector.load %arg20[%c0_2, %c0_3] : memref<32x32xf32, #tpu.memory_space<vmem>>, vector<32x32xf32>
      %4 = arith.index_cast %arg21 : i32 to index
      %c0_4 = arith.constant 0 : index
      %c0_5 = arith.constant 0 : index
      %5 = vector.load %arg0[%4, %c0_4, %c0_5] : memref<8x8x32xf32, #tpu.memory_space<vmem>>, vector<1x8x32xf32>
      %6 = vector.shape_cast %5 : vector<1x8x32xf32> to vector<8x32xf32>
      %7 = vector.extract_strided_slice %6 {offsets = [0, 0], sizes = [4, 32], strides = [1, 1]} : vector<8x32xf32> to vector<4x32xf32>
      %8 = vector.extract_strided_slice %6 {offsets = [4, 0], sizes = [4, 32], strides = [1, 1]} : vector<8x32xf32> to vector<4x32xf32>
      %cst_6 = arith.constant 0.000000e+00 : f32
      %9 = vector.broadcast %cst_6 : f32 to vector<4x32xf32>
      %10 = arith.cmpf ogt, %8, %9 : vector<4x32xf32>
      %c0_7 = arith.constant 0 : index
      %c0_8 = arith.constant 0 : index
      %11 = vector.load %arg2[%c0_7, %c0_8] : memref<4x32xbf16, #tpu.memory_space<vmem>>, vector<4x32xbf16>
      %12 = arith.truncf %3 : vector<32x32xf32> to vector<32x32xbf16>
      %cst_9 = arith.constant dense<0.000000e+00> : vector<4x32xf32>
      %13 = tpu.matmul %11, %12, %cst_9 {dimension_numbers = #tpu.dot_dimension_numbers<[1], [0], [0], [1], [0, 0, 1, 1], [], []>} : vector<4x32xbf16>, vector<32x32xbf16>, vector<4x32xf32> -> vector<4x32xf32>
      %c0_10 = arith.constant 0 : index
      %c0_11 = arith.constant 0 : index
      %14 = vector.load %arg3[%c0_10, %c0_11] : memref<4x1xf32, #tpu.memory_space<vmem>>, vector<4x1xf32>
      %15 = vector.broadcast %14 : vector<4x1xf32> to vector<4x32xf32>
      %16 = arith.addf %13, %15 : vector<4x32xf32>
      %17 = arith.select %10, %7, %16 : vector<4x32xi1>, vector<4x32xf32>
      %18 = tpu.concatenate %17, %8, %3 in 0 : vector<4x32xf32>, vector<4x32xf32>, vector<32x32xf32> -> vector<40x32xf32>
      %c0_12 = arith.constant 0 : index
      %c0_13 = arith.constant 0 : index
      %19 = vector.load %arg4[%c0_12, %c0_13] : memref<32x40xbf16, #tpu.memory_space<vmem>>, vector<32x40xbf16>
      %20 = arith.truncf %18 : vector<40x32xf32> to vector<40x32xbf16>
      %cst_14 = arith.constant dense<0.000000e+00> : vector<32x32xf32>
      %21 = tpu.matmul %19, %20, %cst_14 {dimension_numbers = #tpu.dot_dimension_numbers<[1], [0], [0], [1], [0, 0, 1, 1], [], []>} : vector<32x40xbf16>, vector<40x32xbf16>, vector<32x32xf32> -> vector<32x32xf32>
      %c0_15 = arith.constant 0 : index
      %c0_16 = arith.constant 0 : index
      %22 = vector.load %arg5[%c0_15, %c0_16] : memref<32x1xf32, #tpu.memory_space<vmem>>, vector<32x1xf32>
      %23 = vector.broadcast %22 : vector<32x1xf32> to vector<32x32xf32>
      %24 = arith.addf %21, %23 : vector<32x32xf32>
      %25 = arith.truncf %24 : vector<32x32xf32> to vector<32x32xbf16>
      %c0_17 = arith.constant 0 : index
      %c0_18 = arith.constant 0 : index
      %26 = vector.load %arg1[%c0_17, %c0_18] : memref<32x128xbf16, #tpu.memory_space<vmem>>, vector<32x128xbf16>
      %cst_19 = arith.constant dense<0.000000e+00> : vector<32x128xf32>
      %27 = tpu.matmul %25, %26, %cst_19 {dimension_numbers = #tpu.dot_dimension_numbers<[1], [0], [0], [1], [0, 0, 1, 1], [], []>} : vector<32x32xbf16>, vector<32x128xbf16>, vector<32x128xf32> -> vector<32x128xf32>
      %28 = vector.extract_strided_slice %27 {offsets = [0, 0], sizes = [32, 32], strides = [1, 1]} : vector<32x128xf32> to vector<32x32xf32>
      %29 = vector.extract_strided_slice %27 {offsets = [0, 64], sizes = [32, 32], strides = [1, 1]} : vector<32x128xf32> to vector<32x32xf32>
      %30 = tpu.concatenate %28, %29 in 0 : vector<32x32xf32>, vector<32x32xf32> -> vector<64x32xf32>
      %c0_20 = arith.constant 0 : index
      %c0_21 = arith.constant 0 : index
      %31 = vector.load %arg6[%c0_20, %c0_21] : memref<32x64xbf16, #tpu.memory_space<vmem>>, vector<32x64xbf16>
      %32 = arith.truncf %30 : vector<64x32xf32> to vector<64x32xbf16>
      %cst_22 = arith.constant dense<0.000000e+00> : vector<32x32xf32>
      %33 = tpu.matmul %31, %32, %cst_22 {dimension_numbers = #tpu.dot_dimension_numbers<[1], [0], [0], [1], [0, 0, 1, 1], [], []>} : vector<32x64xbf16>, vector<64x32xbf16>, vector<32x32xf32> -> vector<32x32xf32>
      %c0_23 = arith.constant 0 : index
      %c0_24 = arith.constant 0 : index
      %34 = vector.load %arg7[%c0_23, %c0_24] : memref<32x1xf32, #tpu.memory_space<vmem>>, vector<32x1xf32>
      %35 = vector.broadcast %34 : vector<32x1xf32> to vector<32x32xf32>
      %36 = arith.addf %33, %35 : vector<32x32xf32>
      %37 = tpu.concatenate %36, %3 in 0 : vector<32x32xf32>, vector<32x32xf32> -> vector<64x32xf32>
      %c0_25 = arith.constant 0 : index
      %c0_26 = arith.constant 0 : index
      %38 = vector.load %arg8[%c0_25, %c0_26] : memref<32x64xbf16, #tpu.memory_space<vmem>>, vector<32x64xbf16>
      %39 = arith.truncf %37 : vector<64x32xf32> to vector<64x32xbf16>
      %cst_27 = arith.constant dense<0.000000e+00> : vector<32x32xf32>
      %40 = tpu.matmul %38, %39, %cst_27 {dimension_numbers = #tpu.dot_dimension_numbers<[1], [0], [0], [1], [0, 0, 1, 1], [], []>} : vector<32x64xbf16>, vector<64x32xbf16>, vector<32x32xf32> -> vector<32x32xf32>
      %c0_28 = arith.constant 0 : index
      %c0_29 = arith.constant 0 : index
      %41 = vector.load %arg9[%c0_28, %c0_29] : memref<32x1xf32, #tpu.memory_space<vmem>>, vector<32x1xf32>
      %42 = vector.broadcast %41 : vector<32x1xf32> to vector<32x32xf32>
      %43 = arith.addf %40, %42 : vector<32x32xf32>
      %cst_30 = arith.constant 0.000000e+00 : f32
      %44 = vector.broadcast %cst_30 : f32 to vector<32x32xf32>
      %45 = arith.cmpf oge, %43, %44 : vector<32x32xf32>
      %c0_31 = arith.constant 0 : index
      %46 = memref.load %arg12[%c0_31] : memref<1xf32, #tpu.memory_space<smem>>
      %47 = vector.broadcast %46 : f32 to vector<32x32xf32>
      %48 = arith.mulf %47, %43 : vector<32x32xf32>
      %49 = arith.select %45, %43, %48 : vector<32x32xi1>, vector<32x32xf32>
      %50 = tpu.concatenate %49, %3 in 0 : vector<32x32xf32>, vector<32x32xf32> -> vector<64x32xf32>
      %c0_32 = arith.constant 0 : index
      %c0_33 = arith.constant 0 : index
      %51 = vector.load %arg10[%c0_32, %c0_33] : memref<4x64xbf16, #tpu.memory_space<vmem>>, vector<4x64xbf16>
      %52 = arith.truncf %50 : vector<64x32xf32> to vector<64x32xbf16>
      %cst_34 = arith.constant dense<0.000000e+00> : vector<4x32xf32>
      %53 = tpu.matmul %51, %52, %cst_34 {dimension_numbers = #tpu.dot_dimension_numbers<[1], [0], [0], [1], [0, 0, 1, 1], [], []>} : vector<4x64xbf16>, vector<64x32xbf16>, vector<4x32xf32> -> vector<4x32xf32>
      %c0_35 = arith.constant 0 : index
      %c0_36 = arith.constant 0 : index
      %54 = vector.load %arg11[%c0_35, %c0_36] : memref<4x1xf32, #tpu.memory_space<vmem>>, vector<4x1xf32>
      %55 = vector.broadcast %54 : vector<4x1xf32> to vector<4x32xf32>
      %56 = arith.addf %53, %55 : vector<4x32xf32>
      %57 = arith.select %10, %17, %56 : vector<4x32xi1>, vector<4x32xf32>
      %58 = tpu.concatenate %57, %8, %3 in 0 : vector<4x32xf32>, vector<4x32xf32>, vector<32x32xf32> -> vector<40x32xf32>
      %59 = arith.truncf %58 : vector<40x32xf32> to vector<40x32xbf16>
      %c0_37 = arith.constant 0 : index
      %c0_38 = arith.constant 0 : index
      %60 = vector.load %arg1[%c0_37, %c0_38] : memref<32x128xbf16, #tpu.memory_space<vmem>>, vector<32x128xbf16>
      %cst_39 = arith.constant dense<0.000000e+00> : vector<40x128xf32>
      %61 = tpu.matmul %59, %60, %cst_39 {dimension_numbers = #tpu.dot_dimension_numbers<[1], [0], [0], [1], [0, 0, 1, 1], [], []>} : vector<40x32xbf16>, vector<32x128xbf16>, vector<40x128xf32> -> vector<40x128xf32>
      %62 = vector.extract_strided_slice %61 {offsets = [0, 0], sizes = [40, 32], strides = [1, 1]} : vector<40x128xf32> to vector<40x32xf32>
      %63 = vector.extract_strided_slice %61 {offsets = [0, 32], sizes = [40, 32], strides = [1, 1]} : vector<40x128xf32> to vector<40x32xf32>
      %64 = vector.extract_strided_slice %61 {offsets = [0, 64], sizes = [40, 32], strides = [1, 1]} : vector<40x128xf32> to vector<40x32xf32>
      %65 = vector.extract_strided_slice %61 {offsets = [0, 96], sizes = [40, 32], strides = [1, 1]} : vector<40x128xf32> to vector<40x32xf32>
      %66 = tpu.concatenate %62, %63, %64, %65 in 0 : vector<40x32xf32>, vector<40x32xf32>, vector<40x32xf32>, vector<40x32xf32> -> vector<160x32xf32>
      %67 = tpu.concatenate %58, %66 in 0 : vector<40x32xf32>, vector<160x32xf32> -> vector<200x32xf32>
      %c0_40 = arith.constant 0 : index
      %c0_41 = arith.constant 0 : index
      %68 = vector.load %arg13[%c0_40, %c0_41] : memref<64x200xbf16, #tpu.memory_space<vmem>>, vector<64x200xbf16>
      %69 = arith.truncf %67 : vector<200x32xf32> to vector<200x32xbf16>
      %cst_42 = arith.constant dense<0.000000e+00> : vector<64x32xf32>
      %70 = tpu.matmul %68, %69, %cst_42 {dimension_numbers = #tpu.dot_dimension_numbers<[1], [0], [0], [1], [0, 0, 1, 1], [], []>} : vector<64x200xbf16>, vector<200x32xbf16>, vector<64x32xf32> -> vector<64x32xf32>
      %c0_43 = arith.constant 0 : index
      %c0_44 = arith.constant 0 : index
      %71 = vector.load %arg14[%c0_43, %c0_44] : memref<64x1xf32, #tpu.memory_space<vmem>>, vector<64x1xf32>
      %72 = vector.broadcast %71 : vector<64x1xf32> to vector<64x32xf32>
      %73 = arith.addf %70, %72 : vector<64x32xf32>
      %74 = arith.negf %73 : vector<64x32xf32>
      %75 = math.exp %74 : vector<64x32xf32>
      %cst_45 = arith.constant 1.000000e+00 : f32
      %76 = vector.broadcast %cst_45 : f32 to vector<64x32xf32>
      %77 = arith.addf %76, %75 : vector<64x32xf32>
      %78 = arith.divf %76, %77 : vector<64x32xf32>
      %79 = vector.extract_strided_slice %78 {offsets = [0, 0], sizes = [32, 32], strides = [1, 1]} : vector<64x32xf32> to vector<32x32xf32>
      %80 = vector.extract_strided_slice %78 {offsets = [32, 0], sizes = [32, 32], strides = [1, 1]} : vector<64x32xf32> to vector<32x32xf32>
      %81 = arith.mulf %79, %3 : vector<32x32xf32>
      %82 = tpu.concatenate %57, %8, %81 in 0 : vector<4x32xf32>, vector<4x32xf32>, vector<32x32xf32> -> vector<40x32xf32>
      %83 = arith.truncf %82 : vector<40x32xf32> to vector<40x32xbf16>
      %c0_46 = arith.constant 0 : index
      %c0_47 = arith.constant 0 : index
      %84 = vector.load %arg1[%c0_46, %c0_47] : memref<32x128xbf16, #tpu.memory_space<vmem>>, vector<32x128xbf16>
      %cst_48 = arith.constant dense<0.000000e+00> : vector<40x128xf32>
      %85 = tpu.matmul %83, %84, %cst_48 {dimension_numbers = #tpu.dot_dimension_numbers<[1], [0], [0], [1], [0, 0, 1, 1], [], []>} : vector<40x32xbf16>, vector<32x128xbf16>, vector<40x128xf32> -> vector<40x128xf32>
      %86 = vector.extract_strided_slice %85 {offsets = [0, 0], sizes = [40, 32], strides = [1, 1]} : vector<40x128xf32> to vector<40x32xf32>
      %87 = vector.extract_strided_slice %85 {offsets = [0, 32], sizes = [40, 32], strides = [1, 1]} : vector<40x128xf32> to vector<40x32xf32>
      %88 = vector.extract_strided_slice %85 {offsets = [0, 64], sizes = [40, 32], strides = [1, 1]} : vector<40x128xf32> to vector<40x32xf32>
      %89 = vector.extract_strided_slice %85 {offsets = [0, 96], sizes = [40, 32], strides = [1, 1]} : vector<40x128xf32> to vector<40x32xf32>
      %90 = tpu.concatenate %86, %87, %88, %89 in 0 : vector<40x32xf32>, vector<40x32xf32>, vector<40x32xf32>, vector<40x32xf32> -> vector<160x32xf32>
      %91 = tpu.concatenate %82, %90 in 0 : vector<40x32xf32>, vector<160x32xf32> -> vector<200x32xf32>
      %c0_49 = arith.constant 0 : index
      %c0_50 = arith.constant 0 : index
      %92 = vector.load %arg15[%c0_49, %c0_50] : memref<32x200xbf16, #tpu.memory_space<vmem>>, vector<32x200xbf16>
      %93 = arith.truncf %91 : vector<200x32xf32> to vector<200x32xbf16>
      %cst_51 = arith.constant dense<0.000000e+00> : vector<32x32xf32>
      %94 = tpu.matmul %92, %93, %cst_51 {dimension_numbers = #tpu.dot_dimension_numbers<[1], [0], [0], [1], [0, 0, 1, 1], [], []>} : vector<32x200xbf16>, vector<200x32xbf16>, vector<32x32xf32> -> vector<32x32xf32>
      %c0_52 = arith.constant 0 : index
      %c0_53 = arith.constant 0 : index
      %95 = vector.load %arg16[%c0_52, %c0_53] : memref<32x1xf32, #tpu.memory_space<vmem>>, vector<32x1xf32>
      %96 = vector.broadcast %95 : vector<32x1xf32> to vector<32x32xf32>
      %97 = arith.addf %94, %96 : vector<32x32xf32>
      %98 = math.tanh %97 : vector<32x32xf32>
      %99 = arith.mulf %80, %3 : vector<32x32xf32>
      %cst_54 = arith.constant 1.000000e+00 : f32
      %100 = vector.broadcast %cst_54 : f32 to vector<32x32xf32>
      %101 = arith.subf %100, %80 : vector<32x32xf32>
      %102 = arith.mulf %101, %98 : vector<32x32xf32>
      %103 = arith.addf %99, %102 : vector<32x32xf32>
      %104 = tpu.concatenate %56, %16 in 0 : vector<4x32xf32>, vector<4x32xf32> -> vector<8x32xf32>
      %105 = arith.index_cast %arg21 : i32 to index
      %c0_55 = arith.constant 0 : index
      %c0_56 = arith.constant 0 : index
      %106 = vector.load %arg17[%105, %c0_55, %c0_56] : memref<8x8x32xf32, #tpu.memory_space<vmem>>, vector<1x8x32xf32>
      %107 = vector.shape_cast %106 : vector<1x8x32xf32> to vector<8x32xf32>
      %108 = vector.shape_cast %104 : vector<8x32xf32> to vector<1x8x32xf32>
      tpu.vector_store %arg17[%105, %c0_55, %c0_56], %108 {strides = array<i32>} : memref<8x8x32xf32, #tpu.memory_space<vmem>>, vector<1x8x32xf32>,
      %109 = arith.index_cast %arg21 : i32 to index
      %c0_57 = arith.constant 0 : index
      %c0_58 = arith.constant 0 : index
      %110 = vector.load %arg18[%109, %c0_57, %c0_58] : memref<8x64x32xf32, #tpu.memory_space<vmem>>, vector<1x64x32xf32>
      %111 = vector.shape_cast %110 : vector<1x64x32xf32> to vector<64x32xf32>
      %112 = vector.shape_cast %50 : vector<64x32xf32> to vector<1x64x32xf32>
      tpu.vector_store %arg18[%109, %c0_57, %c0_58], %112 {strides = array<i32>} : memref<8x64x32xf32, #tpu.memory_space<vmem>>, vector<1x64x32xf32>,
      %113 = arith.index_cast %arg21 : i32 to index
      %c0_59 = arith.constant 0 : index
      %c0_60 = arith.constant 0 : index
      %114 = vector.load %arg19[%113, %c0_59, %c0_60] : memref<8x32x32xf32, #tpu.memory_space<vmem>>, vector<1x32x32xf32>
      %115 = vector.shape_cast %114 : vector<1x32x32xf32> to vector<32x32xf32>
      %116 = vector.shape_cast %103 : vector<32x32xf32> to vector<1x32x32xf32>
      tpu.vector_store %arg19[%113, %c0_59, %c0_60], %116 {strides = array<i32>} : memref<8x32x32xf32, #tpu.memory_space<vmem>>, vector<1x32x32xf32>,
      %c0_61 = arith.constant 0 : index
      %c0_62 = arith.constant 0 : index
      %117 = vector.load %arg20[%c0_61, %c0_62] : memref<32x32xf32, #tpu.memory_space<vmem>>, vector<32x32xf32>
      tpu.vector_store %arg20[%c0_61, %c0_62], %103 {strides = array<i32>} : memref<32x32xf32, #tpu.memory_space<vmem>>, vector<32x32xf32>,
    }
    %c8_i32_1 = arith.constant 8 : i32
    return
  }
}

</mosaic_0001>

<llo_original>
// kernel: gril_forward.1
$region0: #{gril_forward.1}
  #allocation0 [shape = 'u32[]', space=smem, size = 0x4, offset = 0x4, fixed_abs, tag = 'smem constant byte address 0x4 - core index']
  #allocation1 [shape = 'u32[144,128]{1,0:T(1,128)}', space=vmem, size = 0x12000, scoped, tag = 'internal scratch']
  #allocation2 [shape = 'f32[32,32]{1,0:T(8,128)}', space=vmem, size = 0x4000, scoped, tag = 'scratch operand']
  #allocation3 [shape = 'f32[1]{0:T(128)S(6)}', space=smem, size = 0x200, scoped, tag = 'scoped memory for gril_forward.1']
  %s0 = inlined_call_operand.vmem [shape: f32[8,8,32], index: 0, kind: input, shape index: {}]
  %s1 = inlined_call_operand.vmem [shape: bf16[32,128], index: 1, kind: input, shape index: {}]
  %s2 = inlined_call_operand.vmem [shape: bf16[4,32], index: 2, kind: input, shape index: {}]
  %s3 = inlined_call_operand.vmem [shape: f32[4,1], index: 3, kind: input, shape index: {}]
  %s4 = inlined_call_operand.vmem [shape: bf16[32,40], index: 4, kind: input, shape index: {}]
  %s5 = inlined_call_operand.vmem [shape: f32[32,1], index: 5, kind: input, shape index: {}]
  %s6 = inlined_call_operand.vmem [shape: bf16[32,64], index: 6, kind: input, shape index: {}]
  %s7 = inlined_call_operand.vmem [shape: f32[32,1], index: 7, kind: input, shape index: {}]
  %s8 = inlined_call_operand.vmem [shape: bf16[32,64], index: 8, kind: input, shape index: {}]
  %s9 = inlined_call_operand.vmem [shape: f32[32,1], index: 9, kind: input, shape index: {}]
  %s10 = inlined_call_operand.vmem [shape: bf16[4,64], index: 10, kind: input, shape index: {}]
  %s11 = inlined_call_operand.vmem [shape: f32[4,1], index: 11, kind: input, shape index: {}]
  %s12 = inlined_call_operand.<no memory space> [shape: f32[1], index: 12, kind: input, shape index: {}]
  %s13 = inlined_call_operand.vmem [shape: bf16[64,200], index: 13, kind: input, shape index: {}]
  %s14 = inlined_call_operand.vmem [shape: f32[64,1], index: 14, kind: input, shape index: {}]
  %s15 = inlined_call_operand.vmem [shape: bf16[32,200], index: 15, kind: input, shape index: {}]
  %s16 = inlined_call_operand.vmem [shape: f32[32,1], index: 16, kind: input, shape index: {}]
  %s17 = inlined_call_operand.vmem [shape: f32[8,8,32], index: 17, kind: output, shape index: {0}]
  %s18 = inlined_call_operand.vmem [shape: f32[8,64,32], index: 18, kind: output, shape index: {1}]
  %s19 = inlined_call_operand.vmem [shape: f32[8,32,32], index: 19, kind: output, shape index: {2}]
  %20 = xla_tuple %s17, %s18, %s19
  %s21 = sld [smem:[#allocation0]]
  $region101: #{gril_forward.1} parent=0
    _
  %s23 = ssub.s32 1, %s21
  %s24 = scalar_select 0, %s23, %s21
  %25 = sst [smem:[#allocation3]] %s12
  // Predicated region
  $region2: #{gril_forward.1} parent=0 // pred_check
    _
  $region3: #{gril_forward.1} parent=0 // pred_check_branch
    %27 = sbr.rel (0) target = $region5
  $region4: #{gril_forward.1} parent=0 // pred_region
    _
  $region5: #{gril_forward.1} parent=0 // pred_fallthru
    _
  // Predicated region
  $region6: #{gril_forward.1} parent=0 // pred_check
    _
  $region7: #{gril_forward.1} parent=0 // pred_check_branch
    %29 = sbr.rel (0) target = $region9
  $region8: #{gril_forward.1} parent=0 // pred_region
    _
  $region9: #{gril_forward.1} parent=0 // pred_fallthru
    _
  // Predicated region
  $region10: #{gril_forward.1} parent=0 // pred_check
    _
  $region11: #{gril_forward.1} parent=0 // pred_check_branch
    %31 = sbr.rel (0) target = $region13
  $region12: #{gril_forward.1} parent=0 // pred_region
    _
  $region13: #{gril_forward.1} parent=0 // pred_fallthru
    _
  // Predicated region
  $region14: #{gril_forward.1} parent=0 // pred_check
    _
  $region15: #{gril_forward.1} parent=0 // pred_check_branch
    %33 = sbr.rel (0) target = $region17
  $region16: #{gril_forward.1} parent=0 // pred_region
    _
  $region17: #{gril_forward.1} parent=0 // pred_fallthru
    _
  // Predicated region
  $region18: #{gril_forward.1} parent=0 // pred_check
    _
  $region19: #{gril_forward.1} parent=0 // pred_check_branch
    %35 = sbr.rel (0) target = $region21
  $region20: #{gril_forward.1} parent=0 // pred_region
    _
  $region21: #{gril_forward.1} parent=0 // pred_fallthru
    _
  // Predicated region
  $region22: #{gril_forward.1} parent=0 // pred_check
    _
  $region23: #{gril_forward.1} parent=0 // pred_check_branch
    %37 = sbr.rel (0) target = $region25
  $region24: #{gril_forward.1} parent=0 // pred_region
    _
  $region25: #{gril_forward.1} parent=0 // pred_fallthru
    _
  // Predicated region
  $region26: #{gril_forward.1} parent=0 // pred_check
    _
  $region27: #{gril_forward.1} parent=0 // pred_check_branch
    %39 = sbr.rel (0) target = $region29
  $region28: #{gril_forward.1} parent=0 // pred_region
    _
  $region29: #{gril_forward.1} parent=0 // pred_fallthru
    _
  // Predicated region
  $region30: #{gril_forward.1} parent=0 // pred_check
    _
  $region31: #{gril_forward.1} parent=0 // pred_check_branch
    %41 = sbr.rel (0) target = $region33
  $region32: #{gril_forward.1} parent=0 // pred_region
    _
  $region33: #{gril_forward.1} parent=0 // pred_fallthru
    _
  // Predicated region
  $region34: #{gril_forward.1} parent=0 // pred_check
    _
  $region35: #{gril_forward.1} parent=0 // pred_check_branch
    %43 = sbr.rel (0) target = $region37
  $region36: #{gril_forward.1} parent=0 // pred_region
    _
  $region37: #{gril_forward.1} parent=0 // pred_fallthru
    _
  // Predicated region
  $region38: #{gril_forward.1} parent=0 // pred_check
    _
  $region39: #{gril_forward.1} parent=0 // pred_check_branch
    %45 = sbr.rel (0) target = $region41
  $region40: #{gril_forward.1} parent=0 // pred_region
    _
  $region41: #{gril_forward.1} parent=0 // pred_fallthru
    _
  // Predicated region
  $region42: #{gril_forward.1} parent=0 // pred_check
    _
  $region43: #{gril_forward.1} parent=0 // pred_check_branch
    %47 = sbr.rel (0) target = $region45
  $region44: #{gril_forward.1} parent=0 // pred_region
    _
  $region45: #{gril_forward.1} parent=0 // pred_fallthru
    _
  // Predicated region
  $region46: #{gril_forward.1} parent=0 // pred_check
    _
  $region47: #{gril_forward.1} parent=0 // pred_check_branch
    %49 = sbr.rel (0) target = $region49
  $region48: #{gril_forward.1} parent=0 // pred_region
    _
  $region49: #{gril_forward.1} parent=0 // pred_fallthru
    _
  // Predicated region
  $region50: #{gril_forward.1} parent=0 // pred_check
    _
  $region51: #{gril_forward.1} parent=0 // pred_check_branch
    %51 = sbr.rel (0) target = $region53
  $region52: #{gril_forward.1} parent=0 // pred_region
    _
  $region53: #{gril_forward.1} parent=0 // pred_fallthru
    _
  // Predicated region
  $region54: #{gril_forward.1} parent=0 // pred_check
    _
  $region55: #{gril_forward.1} parent=0 // pred_check_branch
    %53 = sbr.rel (0) target = $region57
  $region56: #{gril_forward.1} parent=0 // pred_region
    _
  $region57: #{gril_forward.1} parent=0 // pred_fallthru
    _
  // Predicated region
  $region58: #{gril_forward.1} parent=0 // pred_check
    _
  $region59: #{gril_forward.1} parent=0 // pred_check_branch
    %55 = sbr.rel (0) target = $region61
  $region60: #{gril_forward.1} parent=0 // pred_region
    _
  $region61: #{gril_forward.1} parent=0 // pred_fallthru
    _
  // Predicated region
  $region62: #{gril_forward.1} parent=0 // pred_check
    _
  $region63: #{gril_forward.1} parent=0 // pred_check_branch
    %57 = sbr.rel (0) target = $region65
  $region64: #{gril_forward.1} parent=0 // pred_region
    _
  $region65: #{gril_forward.1} parent=0 // pred_fallthru
    _
  // Predicated region
  $region66: #{gril_forward.1} parent=0 // pred_check
    _
  $region67: #{gril_forward.1} parent=0 // pred_check_branch
    %59 = sbr.rel (0) target = $region69
  $region68: #{gril_forward.1} parent=0 // pred_region
    _
  $region69: #{gril_forward.1} parent=0 // pred_fallthru
    _
  %vm61 = vcmask 261120
  %62 = vst.msk [vmem:[#allocation2] sm:$0xff] %vm61, 0.0
  %63 = vst.msk [vmem:[#allocation2 + $0x8] sm:$0xff] %vm61, 0.0
  %64 = vst.msk [vmem:[#allocation2 + $0x10] sm:$0xff] %vm61, 0.0
  %65 = vst.msk [vmem:[#allocation2 + $0x18] sm:$0xff] %vm61, 0.0
  loop: start=0, step=1, limit=8
  $region70: #{gril_forward.1} parent=0 // loop_pre_header
    _
  $region71: #{gril_forward.1} parent=0 // loop_header
    %s67 = sphi 0, %s71
    %p68 = scmp.ge.s32.totalorder %s67, 8
  $region72: #{gril_forward.1} parent=0 // loop_header_branch
    %70 = sbr.rel (%p68) target = $region76
  $region73: #{gril_forward.1} parent=0 // loop_body
    %v72 = vld [vmem:[#allocation2] sm:$0xff]
    %v73 = vld [vmem:[#allocation2 + $0x8] sm:$0xff]
    %v74 = vld [vmem:[#allocation2 + $0x10] sm:$0xff]
    %v75 = vld [vmem:[#allocation2 + $0x18] sm:$0xff]
    %s76 = smul.u32 %s67, 8
    %s77 = scalar_lea.vmem %s0, %s76
    %v78 = vld [vmem:[%s77] sm:$0xff]
    %vm79 = vcmp.gt.f32.partialorder %v78, 0.0
    %v80 = vld [vmem:[%s2] sm:$0x3]
    %v81 = vpack.c.bf16 %v73, %v72
    %v82 = vpack.c.bf16 %v75, %v74
    %v83 = vld [vmem:[%s3] sm:$0xf]
    %85 = vset.pattern.permute.xlu0 0
    %86 = vperm.xlu0 %85, %v83
    %v87 = vpop.permute.xlu0 %86
    %v90 = vsel %vm61, %v80, 0
    %92 = vmatprep.subr.bf16.mxu0 0
    %93 = vmatpush1.bf16.msra.mxu0 %v81
    %94 = vmatprep.subr.bf16.mxu0 0
    %95 = vmatpush1.bf16.msra.mxu0 %v82
    %96 = vmatprep.subr.bf16.mxu0 0
    %97 = vmatpush1.bf16.msra.mxu0 0
    %98 = vmatprep.subr.bf16.mxu0 0
    %99 = vmatpush1.bf16.msra.mxu0 0
    %100 = vmatprep.subr.bf16.mxu0 0
    %101 = vmatpush1.bf16.msra.mxu0 0
    %102 = vmatprep.subr.bf16.mxu0 0
    %103 = vmatpush1.bf16.msra.mxu0 0
    %104 = vmatprep.subr.bf16.mxu0 0
    %105 = vmatpush1.bf16.msra.mxu0 0
    %106 = vmatprep.subr.bf16.mxu0 0
    %107 = vmatpush1.bf16.msra.mxu0 0
    %108 = vmatprep.subr.bf16.mxu0 0
    %109 = vmatpush1.bf16.msra.mxu0 0
    %110 = vmatprep.subr.bf16.mxu0 0
    %111 = vmatpush1.bf16.msra.mxu0 0
    %112 = vmatprep.subr.bf16.mxu0 0
    %113 = vmatpush1.bf16.msra.mxu0 0
    %114 = vmatprep.subr.bf16.mxu0 0
    %115 = vmatpush1.bf16.msra.mxu0 0
    %116 = vmatprep.subr.bf16.mxu0 0
    %117 = vmatpush1.bf16.msra.mxu0 0
    %118 = vmatprep.subr.bf16.mxu0 0
    %119 = vmatpush1.bf16.msra.mxu0 0
    %120 = vmatprep.subr.bf16.mxu0 0
    %121 = vmatpush1.bf16.msra.mxu0 0
    %122 = vmatprep.subr.bf16.mxu0 0
    %123 = vmatpush1.bf16.msra.mxu0 0
    %124 = vmatprep.mubr.bf16.mxu0 0
    %125 = vmatmul.mubr.bf16.gmra.mrb[0].mxu0 %v90
    %v126 = vpop.f32.mrb[0].mxu0
    %v127 = vadd.f32 %v87, %v126
    %v128 = vpop.f32.mrb[0].mxu0
    %v129 = vpop.f32.mrb[0].mxu0
    %v130 = vpop.f32.mrb[0].mxu0
    %131 = vdwg.mxu0
    %v133 = vrot.slane %v78, 4
    %v136 = vrot.slane %v127, 4
    %v138 = vsel %vm79, %v133, %v136
    %v140 = vrot.slane %v138, 4
    %vm142 = vcmask 1043456
    %v143 = vsel %vm142, %v140, %v78
    %v144 = vld [vmem:[%s4] sm:$0xf]
    %v145 = vld [vmem:[%s4 + $0x4] sm:$0xf]
    %v146 = vld [vmem:[%s4 + $0x8] sm:$0xf]
    %v147 = vld [vmem:[%s4 + $0xc] sm:$0xf]
    %v148 = vpack.c.bf16 %v72, %v143
    %v149 = vpack.c.bf16 %v74, %v73
    %v150 = vpack.c.bf16 %v75, %v75
    %v151 = vld [vmem:[%s5] sm:$0xff]
    %v152 = vld [vmem:[%s5 + $0x8] sm:$0xff]
    %v153 = vld [vmem:[%s5 + $0x10] sm:$0xff]
    %v154 = vld [vmem:[%s5 + $0x18] sm:$0xff]
    %156 = vset.pattern.permute.xlu0 0
    %157 = vperm.xlu0 %156, %v151
    %v158 = vpop.permute.xlu0 %157
    %161 = vset.pattern.permute.xlu0 0
    %162 = vperm.xlu0 %161, %v152
    %v163 = vpop.permute.xlu0 %162
    %166 = vset.pattern.permute.xlu0 0
    %167 = vperm.xlu0 %166, %v153
    %v168 = vpop.permute.xlu0 %167
    %171 = vset.pattern.permute.xlu0 0
    %172 = vperm.xlu0 %171, %v154
    %v173 = vpop.permute.xlu0 %172
    %v179 = vunpack.c.l.b16 %v144
    %v180 = vunpack.c.l.b16 %v145
    %v181 = vunpack.c.l.b16 %v146
    %v182 = vunpack.c.l.b16 %v147
    %v183 = vpack.c.b16 %v180, %v179
    %v184 = vpack.c.b16 %v182, %v181
    %vm185 = vcmask 326656
    %v187 = vsel %vm185, %v183, 0
    %v190 = vsel %vm185, %v184, 0
    %v193 = vsel %vm142, %v150, 0
    %195 = vmatprep.subr.bf16.mxu0 0
    %196 = vmatpush1.bf16.msra.mxu0 %v148
    %197 = vmatprep.subr.bf16.mxu0 0
    %198 = vmatpush1.bf16.msra.mxu0 %v149
    %199 = vmatprep.subr.bf16.mxu0 0
    %200 = vmatpush1.bf16.msra.mxu0 %v193
    %201 = vmatprep.subr.bf16.mxu0 0
    %202 = vmatpush1.bf16.msra.mxu0 0
    %203 = vmatprep.subr.bf16.mxu0 0
    %204 = vmatpush1.bf16.msra.mxu0 0
    %205 = vmatprep.subr.bf16.mxu0 0
    %206 = vmatpush1.bf16.msra.mxu0 0
    %207 = vmatprep.subr.bf16.mxu0 0
    %208 = vmatpush1.bf16.msra.mxu0 0
    %209 = vmatprep.subr.bf16.mxu0 0
    %210 = vmatpush1.bf16.msra.mxu0 0
    %211 = vmatprep.subr.bf16.mxu0 0
    %212 = vmatpush1.bf16.msra.mxu0 0
    %213 = vmatprep.subr.bf16.mxu0 0
    %214 = vmatpush1.bf16.msra.mxu0 0
    %215 = vmatprep.subr.bf16.mxu0 0
    %216 = vmatpush1.bf16.msra.mxu0 0
    %217 = vmatprep.subr.bf16.mxu0 0
    %218 = vmatpush1.bf16.msra.mxu0 0
    %219 = vmatprep.subr.bf16.mxu0 0
    %220 = vmatpush1.bf16.msra.mxu0 0
    %221 = vmatprep.subr.bf16.mxu0 0
    %222 = vmatpush1.bf16.msra.mxu0 0
    %223 = vmatprep.subr.bf16.mxu0 0
    %224 = vmatpush1.bf16.msra.mxu0 0
    %225 = vmatprep.subr.bf16.mxu0 0
    %226 = vmatpush1.bf16.msra.mxu0 0
    %227 = vmatprep.mubr.bf16.mxu0 0
    %228 = vmatmul.mubr.bf16.gmra.mrb[0].mxu0 %v187
    %v229 = vpop.f32.mrb[0].mxu0
    %v230 = vadd.f32 %v158, %v229
    %v231 = vpop.f32.mrb[0].mxu0
    %v232 = vpop.f32.mrb[0].mxu0
    %v233 = vadd.f32 %v163, %v232
    %v234 = vpop.f32.mrb[0].mxu0
    %235 = vmatprep.mubr.bf16.mxu0 0
    %236 = vmatmul.mubr.bf16.gmra.mrb[0].mxu0 %v190
    %v237 = vpop.f32.mrb[0].mxu0
    %v238 = vadd.f32 %v168, %v237
    %v239 = vpop.f32.mrb[0].mxu0
    %v240 = vpop.f32.mrb[0].mxu0
    %v241 = vadd.f32 %v173, %v240
    %v242 = vpop.f32.mrb[0].mxu0
    %243 = vdwg.mxu0
    %v244 = vpack.c.bf16 %v233, %v230
    %v245 = vpack.c.bf16 %v241, %v238
    %v246 = vld [vmem:[%s1] sm:$0xf]
    %v247 = vld [vmem:[%s1 + $0x4] sm:$0xf]
    %v248 = vld [vmem:[%s1 + $0x8] sm:$0xf]
    %v249 = vld [vmem:[%s1 + $0xc] sm:$0xf]
    %v254 = vunpack.c.l.b16 %v246
    %v255 = vunpack.c.l.b16 %v247
    %v256 = vunpack.c.l.b16 %v248
    %v257 = vunpack.c.l.b16 %v249
    %v258 = vpack.c.b16 %v255, %v254
    %v259 = vpack.c.b16 %v257, %v256
    %v263 = vsel %vm61, %v244, 0
    %v266 = vsel %vm61, %v245, 0
    %268 = vmatprep.subr.bf16.mxu0 0
    %269 = vmatpush1.bf16.msra.mxu0 %v258
    %270 = vmatprep.subr.bf16.mxu0 0
    %271 = vmatpush1.bf16.msra.mxu0 %v259
    %272 = vmatprep.subr.bf16.mxu0 0
    %273 = vmatpush1.bf16.msra.mxu0 0
    %274 = vmatprep.subr.bf16.mxu0 0
    %275 = vmatpush1.bf16.msra.mxu0 0
    %276 = vmatprep.subr.bf16.mxu0 0
    %277 = vmatpush1.bf16.msra.mxu0 0
    %278 = vmatprep.subr.bf16.mxu0 0
    %279 = vmatpush1.bf16.msra.mxu0 0
    %280 = vmatprep.subr.bf16.mxu0 0
    %281 = vmatpush1.bf16.msra.mxu0 0
    %282 = vmatprep.subr.bf16.mxu0 0
    %283 = vmatpush1.bf16.msra.mxu0 0
    %284 = vmatprep.subr.bf16.mxu0 0
    %285 = vmatpush1.bf16.msra.mxu0 0
    %286 = vmatprep.subr.bf16.mxu0 0
    %287 = vmatpush1.bf16.msra.mxu0 0
    %288 = vmatprep.subr.bf16.mxu0 0
    %289 = vmatpush1.bf16.msra.mxu0 0
    %290 = vmatprep.subr.bf16.mxu0 0
    %291 = vmatpush1.bf16.msra.mxu0 0
    %292 = vmatprep.subr.bf16.mxu0 0
    %293 = vmatpush1.bf16.msra.mxu0 0
    %294 = vmatprep.subr.bf16.mxu0 0
    %295 = vmatpush1.bf16.msra.mxu0 0
    %296 = vmatprep.subr.bf16.mxu0 0
    %297 = vmatpush1.bf16.msra.mxu0 0
    %298 = vmatprep.subr.bf16.mxu0 0
    %299 = vmatpush1.bf16.msra.mxu0 0
    %300 = vmatprep.mubr.bf16.mxu0 0
    %301 = vmatmul.mubr.bf16.gmra.mrb[0].mxu0 %v263
    %v302 = vpop.f32.mrb[0].mxu0
    %v303 = vadd.f32 0.0, %v302
    %v304 = vpop.f32.mrb[0].mxu0
    %v305 = vpop.f32.mrb[0].mxu0
    %v306 = vadd.f32 0.0, %v305
    %v307 = vpop.f32.mrb[0].mxu0
    %308 = vmatprep.mubr.bf16.mxu0 0
    %309 = vmatmul.mubr.bf16.gmra.mrb[0].mxu0 %v266
    %v310 = vpop.f32.mrb[0].mxu0
    %v311 = vadd.f32 0.0, %v310
    %v312 = vpop.f32.mrb[0].mxu0
    %v313 = vpop.f32.mrb[0].mxu0
    %v314 = vadd.f32 0.0, %v313
    %v315 = vpop.f32.mrb[0].mxu0
    %316 = vdwg.mxu0
    %321 = vrot.lane.b32.xlu0 %v303, 64
    %v322 = vpop.permute.xlu0 %321
    %323 = vrot.lane.b32.xlu0 %v306, 64
    %v324 = vpop.permute.xlu0 %323
    %325 = vrot.lane.b32.xlu0 %v311, 64
    %v326 = vpop.permute.xlu0 %325
    %327 = vrot.lane.b32.xlu0 %v314, 64
    %v328 = vpop.permute.xlu0 %327
    %v333 = vld [vmem:[%s6] sm:$0xf]
    %v334 = vld [vmem:[%s6 + $0x4] sm:$0xf]
    %v335 = vld [vmem:[%s6 + $0x8] sm:$0xf]
    %v336 = vld [vmem:[%s6 + $0xc] sm:$0xf]
    %v337 = vpack.c.bf16 %v306, %v303
    %v338 = vpack.c.bf16 %v314, %v311
    %v339 = vpack.c.bf16 %v324, %v322
    %v340 = vpack.c.bf16 %v328, %v326
    %v341 = vld [vmem:[%s7] sm:$0xff]
    %v342 = vld [vmem:[%s7 + $0x8] sm:$0xff]
    %v343 = vld [vmem:[%s7 + $0x10] sm:$0xff]
    %v344 = vld [vmem:[%s7 + $0x18] sm:$0xff]
    %346 = vset.pattern.permute.xlu0 0
    %347 = vperm.xlu0 %346, %v341
    %v348 = vpop.permute.xlu0 %347
    %351 = vset.pattern.permute.xlu0 0
    %352 = vperm.xlu0 %351, %v342
    %v353 = vpop.permute.xlu0 %352
    %356 = vset.pattern.permute.xlu0 0
    %357 = vperm.xlu0 %356, %v343
    %v358 = vpop.permute.xlu0 %357
    %361 = vset.pattern.permute.xlu0 0
    %362 = vperm.xlu0 %361, %v344
    %v363 = vpop.permute.xlu0 %362
    %v369 = vunpack.c.l.b16 %v333
    %v370 = vunpack.c.l.b16 %v334
    %v371 = vunpack.c.l.b16 %v335
    %v372 = vunpack.c.l.b16 %v336
    %v373 = vpack.c.b16 %v370, %v369
    %v374 = vpack.c.b16 %v372, %v371
    %vm375 = vcmask 523264
    %v377 = vsel %vm375, %v373, 0
    %v380 = vsel %vm375, %v374, 0
    %382 = vmatprep.subr.bf16.mxu0 0
    %383 = vmatpush1.bf16.msra.mxu0 %v337
    %384 = vmatprep.subr.bf16.mxu0 0
    %385 = vmatpush1.bf16.msra.mxu0 %v338
    %386 = vmatprep.subr.bf16.mxu0 0
    %387 = vmatpush1.bf16.msra.mxu0 %v339
    %388 = vmatprep.subr.bf16.mxu0 0
    %389 = vmatpush1.bf16.msra.mxu0 %v340
    %390 = vmatprep.subr.bf16.mxu0 0
    %391 = vmatpush1.bf16.msra.mxu0 0
    %392 = vmatprep.subr.bf16.mxu0 0
    %393 = vmatpush1.bf16.msra.mxu0 0
    %394 = vmatprep.subr.bf16.mxu0 0
    %395 = vmatpush1.bf16.msra.mxu0 0
    %396 = vmatprep.subr.bf16.mxu0 0
    %397 = vmatpush1.bf16.msra.mxu0 0
    %398 = vmatprep.subr.bf16.mxu0 0
    %399 = vmatpush1.bf16.msra.mxu0 0
    %400 = vmatprep.subr.bf16.mxu0 0
    %401 = vmatpush1.bf16.msra.mxu0 0
    %402 = vmatprep.subr.bf16.mxu0 0
    %403 = vmatpush1.bf16.msra.mxu0 0
    %404 = vmatprep.subr.bf16.mxu0 0
    %405 = vmatpush1.bf16.msra.mxu0 0
    %406 = vmatprep.subr.bf16.mxu0 0
    %407 = vmatpush1.bf16.msra.mxu0 0
    %408 = vmatprep.subr.bf16.mxu0 0
    %409 = vmatpush1.bf16.msra.mxu0 0
    %410 = vmatprep.subr.bf16.mxu0 0
    %411 = vmatpush1.bf16.msra.mxu0 0
    %412 = vmatprep.subr.bf16.mxu0 0
    %413 = vmatpush1.bf16.msra.mxu0 0
    %414 = vmatprep.mubr.bf16.mxu0 0
    %415 = vmatmul.mubr.bf16.gmra.mrb[0].mxu0 %v377
    %v416 = vpop.f32.mrb[0].mxu0
    %v417 = vadd.f32 %v348, %v416
    %v418 = vpop.f32.mrb[0].mxu0
    %v419 = vpop.f32.mrb[0].mxu0
    %v420 = vadd.f32 %v353, %v419
    %v421 = vpop.f32.mrb[0].mxu0
    %422 = vmatprep.mubr.bf16.mxu0 0
    %423 = vmatmul.mubr.bf16.gmra.mrb[0].mxu0 %v380
    %v424 = vpop.f32.mrb[0].mxu0
    %v425 = vadd.f32 %v358, %v424
    %v426 = vpop.f32.mrb[0].mxu0
    %v427 = vpop.f32.mrb[0].mxu0
    %v428 = vadd.f32 %v363, %v427
    %v429 = vpop.f32.mrb[0].mxu0
    %430 = vdwg.mxu0
    %v431 = vld [vmem:[%s8] sm:$0xf]
    %v432 = vld [vmem:[%s8 + $0x4] sm:$0xf]
    %v433 = vld [vmem:[%s8 + $0x8] sm:$0xf]
    %v434 = vld [vmem:[%s8 + $0xc] sm:$0xf]
    %v435 = vpack.c.bf16 %v420, %v417
    %v436 = vpack.c.bf16 %v428, %v425
    %v437 = vld [vmem:[%s9] sm:$0xff]
    %v438 = vld [vmem:[%s9 + $0x8] sm:$0xff]
    %v439 = vld [vmem:[%s9 + $0x10] sm:$0xff]
    %v440 = vld [vmem:[%s9 + $0x18] sm:$0xff]
    %442 = vset.pattern.permute.xlu0 0
    %443 = vperm.xlu0 %442, %v437
    %v444 = vpop.permute.xlu0 %443
    %447 = vset.pattern.permute.xlu0 0
    %448 = vperm.xlu0 %447, %v438
    %v449 = vpop.permute.xlu0 %448
    %452 = vset.pattern.permute.xlu0 0
    %453 = vperm.xlu0 %452, %v439
    %v454 = vpop.permute.xlu0 %453
    %457 = vset.pattern.permute.xlu0 0
    %458 = vperm.xlu0 %457, %v440
    %v459 = vpop.permute.xlu0 %458
    %v465 = vunpack.c.l.b16 %v431
    %v466 = vunpack.c.l.b16 %v432
    %v467 = vunpack.c.l.b16 %v433
    %v468 = vunpack.c.l.b16 %v434
    %v469 = vpack.c.b16 %v466, %v465
    %v470 = vpack.c.b16 %v468, %v467
    %v472 = vsel %vm375, %v469, 0
    %v475 = vsel %vm375, %v470, 0
    %477 = vmatprep.subr.bf16.mxu0 0
    %478 = vmatpush1.bf16.msra.mxu0 %v435
    %479 = vmatprep.subr.bf16.mxu0 0
    %480 = vmatpush1.bf16.msra.mxu0 %v436
    %481 = vmatprep.subr.bf16.mxu0 0
    %482 = vmatpush1.bf16.msra.mxu0 %v81
    %483 = vmatprep.subr.bf16.mxu0 0
    %484 = vmatpush1.bf16.msra.mxu0 %v82
    %485 = vmatprep.subr.bf16.mxu0 0
    %486 = vmatpush1.bf16.msra.mxu0 0
    %487 = vmatprep.subr.bf16.mxu0 0
    %488 = vmatpush1.bf16.msra.mxu0 0
    %489 = vmatprep.subr.bf16.mxu0 0
    %490 = vmatpush1.bf16.msra.mxu0 0
    %491 = vmatprep.subr.bf16.mxu0 0
    %492 = vmatpush1.bf16.msra.mxu0 0
    %493 = vmatprep.subr.bf16.mxu0 0
    %494 = vmatpush1.bf16.msra.mxu0 0
    %495 = vmatprep.subr.bf16.mxu0 0
    %496 = vmatpush1.bf16.msra.mxu0 0
    %497 = vmatprep.subr.bf16.mxu0 0
    %498 = vmatpush1.bf16.msra.mxu0 0
    %499 = vmatprep.subr.bf16.mxu0 0
    %500 = vmatpush1.bf16.msra.mxu0 0
    %501 = vmatprep.subr.bf16.mxu0 0
    %502 = vmatpush1.bf16.msra.mxu0 0
    %503 = vmatprep.subr.bf16.mxu0 0
    %504 = vmatpush1.bf16.msra.mxu0 0
    %505 = vmatprep.subr.bf16.mxu0 0
    %506 = vmatpush1.bf16.msra.mxu0 0
    %507 = vmatprep.subr.bf16.mxu0 0
    %508 = vmatpush1.bf16.msra.mxu0 0
    %509 = vmatprep.mubr.bf16.mxu0 0
    %510 = vmatmul.mubr.bf16.gmra.mrb[0].mxu0 %v472
    %v511 = vpop.f32.mrb[0].mxu0
    %v512 = vadd.f32 %v444, %v511
    %v513 = vpop.f32.mrb[0].mxu0
    %v514 = vpop.f32.mrb[0].mxu0
    %v515 = vadd.f32 %v449, %v514
    %v516 = vpop.f32.mrb[0].mxu0
    %517 = vmatprep.mubr.bf16.mxu0 0
    %518 = vmatmul.mubr.bf16.gmra.mrb[0].mxu0 %v475
    %v519 = vpop.f32.mrb[0].mxu0
    %v520 = vadd.f32 %v454, %v519
    %v521 = vpop.f32.mrb[0].mxu0
    %v522 = vpop.f32.mrb[0].mxu0
    %v523 = vadd.f32 %v459, %v522
    %v524 = vpop.f32.mrb[0].mxu0
    %525 = vdwg.mxu0
    %vm526 = vcmp.ge.f32.partialorder %v512, 0.0
    %vm527 = vcmp.ge.f32.partialorder %v515, 0.0
    %vm528 = vcmp.ge.f32.partialorder %v520, 0.0
    %vm529 = vcmp.ge.f32.partialorder %v523, 0.0
    %s530 = sld [smem:[#allocation3]]
    %v531 = vstv %s530
    %v532 = vmul.f32 %v531, %v512
    %v533 = vmul.f32 %v531, %v515
    %v534 = vmul.f32 %v531, %v520
    %v535 = vmul.f32 %v531, %v523
    %v536 = vsel %vm526, %v512, %v532
    %v537 = vsel %vm527, %v515, %v533
    %v538 = vsel %vm528, %v520, %v534
    %v539 = vsel %vm529, %v523, %v535
    %v540 = vld [vmem:[%s10] sm:$0x3]
    %v541 = vpack.c.bf16 %v537, %v536
    %v542 = vpack.c.bf16 %v539, %v538
    %v543 = vld [vmem:[%s11] sm:$0xf]
    %545 = vset.pattern.permute.xlu0 0
    %546 = vperm.xlu0 %545, %v543
    %v547 = vpop.permute.xlu0 %546
    %v550 = vsel %vm375, %v540, 0
    %552 = vmatprep.subr.bf16.mxu0 0
    %553 = vmatpush1.bf16.msra.mxu0 %v541
    %554 = vmatprep.subr.bf16.mxu0 0
    %555 = vmatpush1.bf16.msra.mxu0 %v542
    %556 = vmatprep.subr.bf16.mxu0 0
    %557 = vmatpush1.bf16.msra.mxu0 %v81
    %558 = vmatprep.subr.bf16.mxu0 0
    %559 = vmatpush1.bf16.msra.mxu0 %v82
    %560 = vmatprep.subr.bf16.mxu0 0
    %561 = vmatpush1.bf16.msra.mxu0 0
    %562 = vmatprep.subr.bf16.mxu0 0
    %563 = vmatpush1.bf16.msra.mxu0 0
    %564 = vmatprep.subr.bf16.mxu0 0
    %565 = vmatpush1.bf16.msra.mxu0 0
    %566 = vmatprep.subr.bf16.mxu0 0
    %567 = vmatpush1.bf16.msra.mxu0 0
    %568 = vmatprep.subr.bf16.mxu0 0
    %569 = vmatpush1.bf16.msra.mxu0 0
    %570 = vmatprep.subr.bf16.mxu0 0
    %571 = vmatpush1.bf16.msra.mxu0 0
    %572 = vmatprep.subr.bf16.mxu0 0
    %573 = vmatpush1.bf16.msra.mxu0 0
    %574 = vmatprep.subr.bf16.mxu0 0
    %575 = vmatpush1.bf16.msra.mxu0 0
    %576 = vmatprep.subr.bf16.mxu0 0
    %577 = vmatpush1.bf16.msra.mxu0 0
    %578 = vmatprep.subr.bf16.mxu0 0
    %579 = vmatpush1.bf16.msra.mxu0 0
    %580 = vmatprep.subr.bf16.mxu0 0
    %581 = vmatpush1.bf16.msra.mxu0 0
    %582 = vmatprep.subr.bf16.mxu0 0
    %583 = vmatpush1.bf16.msra.mxu0 0
    %584 = vmatprep.mubr.bf16.mxu0 0
    %585 = vmatmul.mubr.bf16.gmra.mrb[0].mxu0 %v550
    %v586 = vpop.f32.mrb[0].mxu0
    %v587 = vadd.f32 %v547, %v586
    %v588 = vpop.f32.mrb[0].mxu0
    %v589 = vpop.f32.mrb[0].mxu0
    %v590 = vpop.f32.mrb[0].mxu0
    %591 = vdwg.mxu0
    %v593 = vrot.slane %v587, 4
    %v595 = vsel %vm79, %v133, %v593
    %v597 = vrot.slane %v595, 4
    %v599 = vsel %vm142, %v597, %v78
    %v600 = vpack.c.bf16 %v72, %v599
    %v602 = vsel %vm61, %v600, 0
    %v605 = vsel %vm61, %v149, 0
    %v607 = vsel %vm61, %v150, 0
    %609 = vmatprep.subr.bf16.mxu0 0
    %610 = vmatpush1.bf16.msra.mxu0 %v258
    %611 = vmatprep.subr.bf16.mxu0 0
    %612 = vmatpush1.bf16.msra.mxu0 %v259
    %613 = vmatprep.subr.bf16.mxu0 0
    %614 = vmatpush1.bf16.msra.mxu0 0
    %615 = vmatprep.subr.bf16.mxu0 0
    %616 = vmatpush1.bf16.msra.mxu0 0
    %617 = vmatprep.subr.bf16.mxu0 0
    %618 = vmatpush1.bf16.msra.mxu0 0
    %619 = vmatprep.subr.bf16.mxu0 0
    %620 = vmatpush1.bf16.msra.mxu0 0
    %621 = vmatprep.subr.bf16.mxu0 0
    %622 = vmatpush1.bf16.msra.mxu0 0
    %623 = vmatprep.subr.bf16.mxu0 0
    %624 = vmatpush1.bf16.msra.mxu0 0
    %625 = vmatprep.subr.bf16.mxu0 0
    %626 = vmatpush1.bf16.msra.mxu0 0
    %627 = vmatprep.subr.bf16.mxu0 0
    %628 = vmatpush1.bf16.msra.mxu0 0
    %629 = vmatprep.subr.bf16.mxu0 0
    %630 = vmatpush1.bf16.msra.mxu0 0
    %631 = vmatprep.subr.bf16.mxu0 0
    %632 = vmatpush1.bf16.msra.mxu0 0
    %633 = vmatprep.subr.bf16.mxu0 0
    %634 = vmatpush1.bf16.msra.mxu0 0
    %635 = vmatprep.subr.bf16.mxu0 0
    %636 = vmatpush1.bf16.msra.mxu0 0
    %637 = vmatprep.subr.bf16.mxu0 0
    %638 = vmatpush1.bf16.msra.mxu0 0
    %639 = vmatprep.subr.bf16.mxu0 0
    %640 = vmatpush1.bf16.msra.mxu0 0
    %641 = vmatprep.mubr.bf16.mxu0 0
    %642 = vmatmul.mubr.bf16.gmra.mrb[0].mxu0 %v602
    %v643 = vpop.f32.mrb[0].mxu0
    %v644 = vadd.f32 0.0, %v643
    %v645 = vpop.f32.mrb[0].mxu0
    %v646 = vpop.f32.mrb[0].mxu0
    %v647 = vadd.f32 0.0, %v646
    %v648 = vpop.f32.mrb[0].mxu0
    %649 = vmatprep.mubr.bf16.mxu0 0
    %650 = vmatmul.mubr.bf16.gmra.mrb[0].mxu0 %v605
    %v651 = vpop.f32.mrb[0].mxu0
    %v652 = vadd.f32 0.0, %v651
    %v653 = vpop.f32.mrb[0].mxu0
    %v654 = vpop.f32.mrb[0].mxu0
    %v655 = vadd.f32 0.0, %v654
    %v656 = vpop.f32.mrb[0].mxu0
    %657 = vmatprep.mubr.bf16.mxu0 0
    %658 = vmatmul.mubr.bf16.gmra.mrb[0].mxu0 %v607
    %v659 = vpop.f32.mrb[0].mxu0
    %v660 = vadd.f32 0.0, %v659
    %v661 = vpop.f32.mrb[0].mxu0
    %v662 = vpop.f32.mrb[0].mxu0
    %v663 = vpop.f32.mrb[0].mxu0
    %664 = vdwg.mxu0
    %670 = vrot.lane.b32.xlu0 %v644, 96
    %v671 = vpop.permute.xlu0 %670
    %672 = vrot.lane.b32.xlu0 %v647, 96
    %v673 = vpop.permute.xlu0 %672
    %674 = vrot.lane.b32.xlu0 %v652, 96
    %v675 = vpop.permute.xlu0 %674
    %676 = vrot.lane.b32.xlu0 %v655, 96
    %v677 = vpop.permute.xlu0 %676
    %678 = vrot.lane.b32.xlu0 %v660, 96
    %v679 = vpop.permute.xlu0 %678
    %685 = vrot.lane.b32.xlu0 %v644, 64
    %v686 = vpop.permute.xlu0 %685
    %687 = vrot.lane.b32.xlu0 %v647, 64
    %v688 = vpop.permute.xlu0 %687
    %689 = vrot.lane.b32.xlu0 %v652, 64
    %v690 = vpop.permute.xlu0 %689
    %691 = vrot.lane.b32.xlu0 %v655, 64
    %v692 = vpop.permute.xlu0 %691
    %693 = vrot.lane.b32.xlu0 %v660, 64
    %v694 = vpop.permute.xlu0 %693
    %700 = vrot.lane.b32.xlu0 %v644, 32
    %v701 = vpop.permute.xlu0 %700
    %702 = vrot.lane.b32.xlu0 %v647, 32
    %v703 = vpop.permute.xlu0 %702
    %704 = vrot.lane.b32.xlu0 %v652, 32
    %v705 = vpop.permute.xlu0 %704
    %706 = vrot.lane.b32.xlu0 %v655, 32
    %v707 = vpop.permute.xlu0 %706
    %708 = vrot.lane.b32.xlu0 %v660, 32
    %v709 = vpop.permute.xlu0 %708
    %v715 = vld [vmem:[%s13] sm:$0xff]
    %v716 = vld [vmem:[%s13 + $0x8] sm:$0xff]
    %v717 = vld [vmem:[%s13 + $0x10] sm:$0xff]
    %v718 = vld [vmem:[%s13 + $0x18] sm:$0xff]
    %v719 = vld [vmem:[%s13 + $0x20] sm:$0xff]
    %v720 = vld [vmem:[%s13 + $0x28] sm:$0xff]
    %v721 = vld [vmem:[%s13 + $0x30] sm:$0xff]
    %v722 = vld [vmem:[%s13 + $0x38] sm:$0xff]
    %v723 = vpack.c.bf16 %v644, %v75
    %v724 = vpack.c.bf16 %v652, %v647
    %v725 = vpack.c.bf16 %v660, %v655
    %v726 = vpack.c.bf16 %v673, %v671
    %v727 = vpack.c.bf16 %v677, %v675
    %v728 = vpack.c.bf16 %v686, %v679
    %v729 = vpack.c.bf16 %v690, %v688
    %v730 = vpack.c.bf16 %v694, %v692
    %v731 = vpack.c.bf16 %v703, %v701
    %v732 = vpack.c.bf16 %v707, %v705
    %v733 = vpack.c.bf16 %v709, %v709
    %v734 = vld [vmem:[%s14] sm:$0xff]
    %v735 = vld [vmem:[%s14 + $0x8] sm:$0xff]
    %v736 = vld [vmem:[%s14 + $0x10] sm:$0xff]
    %v737 = vld [vmem:[%s14 + $0x18] sm:$0xff]
    %v738 = vld [vmem:[%s14 + $0x20] sm:$0xff]
    %v739 = vld [vmem:[%s14 + $0x28] sm:$0xff]
    %v740 = vld [vmem:[%s14 + $0x30] sm:$0xff]
    %v741 = vld [vmem:[%s14 + $0x38] sm:$0xff]
    %743 = vset.pattern.permute.xlu0 0
    %744 = vperm.xlu0 %743, %v734
    %v745 = vpop.permute.xlu0 %744
    %748 = vset.pattern.permute.xlu0 0
    %749 = vperm.xlu0 %748, %v735
    %v750 = vpop.permute.xlu0 %749
    %753 = vset.pattern.permute.xlu0 0
    %754 = vperm.xlu0 %753, %v736
    %v755 = vpop.permute.xlu0 %754
    %758 = vset.pattern.permute.xlu0 0
    %759 = vperm.xlu0 %758, %v737
    %v760 = vpop.permute.xlu0 %759
    %763 = vset.pattern.permute.xlu0 0
    %764 = vperm.xlu0 %763, %v738
    %v765 = vpop.permute.xlu0 %764
    %768 = vset.pattern.permute.xlu0 0
    %769 = vperm.xlu0 %768, %v739
    %v770 = vpop.permute.xlu0 %769
    %773 = vset.pattern.permute.xlu0 0
    %774 = vperm.xlu0 %773, %v740
    %v775 = vpop.permute.xlu0 %774
    %778 = vset.pattern.permute.xlu0 0
    %779 = vperm.xlu0 %778, %v741
    %v780 = vpop.permute.xlu0 %779
    %v790 = vunpack.c.l.b16 %v715
    %v791 = vunpack.c.h.b16 %v715
    %v792 = vunpack.c.l.b16 %v716
    %v793 = vunpack.c.h.b16 %v716
    %v794 = vunpack.c.l.b16 %v717
    %v795 = vunpack.c.h.b16 %v717
    %v796 = vunpack.c.l.b16 %v718
    %v797 = vunpack.c.h.b16 %v718
    %v798 = vunpack.c.l.b16 %v719
    %v799 = vunpack.c.h.b16 %v719
    %v800 = vunpack.c.l.b16 %v720
    %v801 = vunpack.c.h.b16 %v720
    %v802 = vunpack.c.l.b16 %v721
    %v803 = vunpack.c.h.b16 %v721
    %v804 = vunpack.c.l.b16 %v722
    %v805 = vunpack.c.h.b16 %v722
    %v806 = vpack.c.b16 %v792, %v790
    %v807 = vpack.c.b16 %v793, %v791
    %v808 = vpack.c.b16 %v796, %v794
    %v809 = vpack.c.b16 %v797, %v795
    %v810 = vpack.c.b16 %v800, %v798
    %v811 = vpack.c.b16 %v801, %v799
    %v812 = vpack.c.b16 %v804, %v802
    %v813 = vpack.c.b16 %v805, %v803
    %vm818 = vcmask 588800
    %v820 = vsel %vm818, %v807, 0
    %v823 = vsel %vm818, %v809, 0
    %v826 = vsel %vm818, %v811, 0
    %v829 = vsel %vm818, %v813, 0
    %v832 = vsel %vm142, %v733, 0
    %834 = vmatprep.subr.bf16.mxu0 0
    %835 = vmatpush1.bf16.msra.mxu0 %v600
    %836 = vmatprep.subr.bf16.mxu0 0
    %837 = vmatpush1.bf16.msra.mxu0 %v149
    %838 = vmatprep.subr.bf16.mxu0 0
    %839 = vmatpush1.bf16.msra.mxu0 %v723
    %840 = vmatprep.subr.bf16.mxu0 0
    %841 = vmatpush1.bf16.msra.mxu0 %v724
    %842 = vmatprep.subr.bf16.mxu0 0
    %843 = vmatpush1.bf16.msra.mxu0 %v725
    %844 = vmatprep.subr.bf16.mxu0 0
    %845 = vmatpush1.bf16.msra.mxu0 %v726
    %846 = vmatprep.subr.bf16.mxu0 0
    %847 = vmatpush1.bf16.msra.mxu0 %v727
    %848 = vmatprep.subr.bf16.mxu0 0
    %849 = vmatpush1.bf16.msra.mxu0 %v728
    %850 = vmatprep.subr.bf16.mxu0 0
    %851 = vmatpush1.bf16.msra.mxu0 %v729
    %852 = vmatprep.subr.bf16.mxu0 0
    %853 = vmatpush1.bf16.msra.mxu0 %v730
    %854 = vmatprep.subr.bf16.mxu0 0
    %855 = vmatpush1.bf16.msra.mxu0 %v731
    %856 = vmatprep.subr.bf16.mxu0 0
    %857 = vmatpush1.bf16.msra.mxu0 %v732
    %858 = vmatprep.subr.bf16.mxu0 0
    %859 = vmatpush1.bf16.msra.mxu0 %v832
    %860 = vmatprep.subr.bf16.mxu0 0
    %861 = vmatpush1.bf16.msra.mxu0 0
    %862 = vmatprep.subr.bf16.mxu0 0
    %863 = vmatpush1.bf16.msra.mxu0 0
    %864 = vmatprep.subr.bf16.mxu0 0
    %865 = vmatpush1.bf16.msra.mxu0 0
    %866 = vmatprep.mubr.bf16.mxu0 %v820
    %867 = vmatmul.mubr.bf16.gmra.mrb[0].mxu0 %v806
    %v868 = vpop.f32.mrb[0].mxu0
    %v869 = vadd.f32 %v745, %v868
    %v870 = vpop.f32.mrb[0].mxu0
    %v871 = vpop.f32.mrb[0].mxu0
    %v872 = vadd.f32 %v750, %v871
    %v873 = vpop.f32.mrb[0].mxu0
    %874 = vmatprep.mubr.bf16.mxu0 %v823
    %875 = vmatmul.mubr.bf16.gmra.mrb[0].mxu0 %v808
    %v876 = vpop.f32.mrb[0].mxu0
    %v877 = vadd.f32 %v755, %v876
    %v878 = vpop.f32.mrb[0].mxu0
    %v879 = vpop.f32.mrb[0].mxu0
    %v880 = vadd.f32 %v760, %v879
    %v881 = vpop.f32.mrb[0].mxu0
    %882 = vmatprep.mubr.bf16.mxu0 %v826
    %883 = vmatmul.mubr.bf16.gmra.mrb[0].mxu0 %v810
    %v884 = vpop.f32.mrb[0].mxu0
    %v885 = vadd.f32 %v765, %v884
    %v886 = vpop.f32.mrb[0].mxu0
    %v887 = vpop.f32.mrb[0].mxu0
    %v888 = vadd.f32 %v770, %v887
    %v889 = vpop.f32.mrb[0].mxu0
    %890 = vmatprep.mubr.bf16.mxu0 %v829
    %891 = vmatmul.mubr.bf16.gmra.mrb[0].mxu0 %v812
    %v892 = vpop.f32.mrb[0].mxu0
    %v893 = vadd.f32 %v775, %v892
    %v894 = vpop.f32.mrb[0].mxu0
    %v895 = vpop.f32.mrb[0].mxu0
    %v896 = vadd.f32 %v780, %v895
    %v897 = vpop.f32.mrb[0].mxu0
    %898 = vdwg.mxu0
    %v899 = vxor.u32 %v869, 2147483648
    %v900 = vxor.u32 %v872, 2147483648
    %v901 = vxor.u32 %v877, 2147483648
    %v902 = vxor.u32 %v880, 2147483648
    %v903 = vxor.u32 %v885, 2147483648
    %v904 = vxor.u32 %v888, 2147483648
    %v905 = vxor.u32 %v893, 2147483648
    %v906 = vxor.u32 %v896, 2147483648
    %v907 = vmul.f32 %v899, 1.442695
    %v908 = vpow.pop %v907
    %v909 = vmul.f32 %v900, 1.442695
    %v910 = vpow.pop %v909
    %v911 = vmul.f32 %v901, 1.442695
    %v912 = vpow.pop %v911
    %v913 = vmul.f32 %v902, 1.442695
    %v914 = vpow.pop %v913
    %v915 = vmul.f32 %v903, 1.442695
    %v916 = vpow.pop %v915
    %v917 = vmul.f32 %v904, 1.442695
    %v918 = vpow.pop %v917
    %v919 = vmul.f32 %v905, 1.442695
    %v920 = vpow.pop %v919
    %v921 = vmul.f32 %v906, 1.442695
    %v922 = vpow.pop %v921
    %v923 = vadd.f32 %v908, 1.0
    %v924 = vadd.f32 %v910, 1.0
    %v925 = vadd.f32 %v912, 1.0
    %v926 = vadd.f32 %v914, 1.0
    %v927 = vadd.f32 %v916, 1.0
    %v928 = vadd.f32 %v918, 1.0
    %v929 = vadd.f32 %v920, 1.0
    %v930 = vadd.f32 %v922, 1.0
    %v931 = vrcp.pop %v923
    %v932 = vmul.f32 1.0, %v931
    %v933 = vrcp.pop %v924
    %v934 = vmul.f32 1.0, %v933
    %v935 = vrcp.pop %v925
    %v936 = vmul.f32 1.0, %v935
    %v937 = vrcp.pop %v926
    %v938 = vmul.f32 1.0, %v937
    %v939 = vrcp.pop %v927
    %v940 = vmul.f32 1.0, %v939
    %v941 = vrcp.pop %v928
    %v942 = vmul.f32 1.0, %v941
    %v943 = vrcp.pop %v929
    %v944 = vmul.f32 1.0, %v943
    %v945 = vrcp.pop %v930
    %v946 = vmul.f32 1.0, %v945
    %v947 = vmul.f32 %v932, %v72
    %v948 = vmul.f32 %v934, %v73
    %v949 = vmul.f32 %v936, %v74
    %v950 = vmul.f32 %v938, %v75
    %v951 = vpack.c.bf16 %v947, %v599
    %v952 = vpack.c.bf16 %v949, %v948
    %v953 = vpack.c.bf16 %v950, %v950
    %v955 = vsel %vm61, %v951, 0
    %v958 = vsel %vm61, %v952, 0
    %v961 = vsel %vm61, %v953, 0
    %963 = vmatprep.subr.bf16.mxu0 0
    %964 = vmatpush1.bf16.msra.mxu0 %v258
    %965 = vmatprep.subr.bf16.mxu0 0
    %966 = vmatpush1.bf16.msra.mxu0 %v259
    %967 = vmatprep.subr.bf16.mxu0 0
    %968 = vmatpush1.bf16.msra.mxu0 0
    %969 = vmatprep.subr.bf16.mxu0 0
    %970 = vmatpush1.bf16.msra.mxu0 0
    %971 = vmatprep.subr.bf16.mxu0 0
    %972 = vmatpush1.bf16.msra.mxu0 0
    %973 = vmatprep.subr.bf16.mxu0 0
    %974 = vmatpush1.bf16.msra.mxu0 0
    %975 = vmatprep.subr.bf16.mxu0 0
    %976 = vmatpush1.bf16.msra.mxu0 0
    %977 = vmatprep.subr.bf16.mxu0 0
    %978 = vmatpush1.bf16.msra.mxu0 0
    %979 = vmatprep.subr.bf16.mxu0 0
    %980 = vmatpush1.bf16.msra.mxu0 0
    %981 = vmatprep.subr.bf16.mxu0 0
    %982 = vmatpush1.bf16.msra.mxu0 0
    %983 = vmatprep.subr.bf16.mxu0 0
    %984 = vmatpush1.bf16.msra.mxu0 0
    %985 = vmatprep.subr.bf16.mxu0 0
    %986 = vmatpush1.bf16.msra.mxu0 0
    %987 = vmatprep.subr.bf16.mxu0 0
    %988 = vmatpush1.bf16.msra.mxu0 0
    %989 = vmatprep.subr.bf16.mxu0 0
    %990 = vmatpush1.bf16.msra.mxu0 0
    %991 = vmatprep.subr.bf16.mxu0 0
    %992 = vmatpush1.bf16.msra.mxu0 0
    %993 = vmatprep.subr.bf16.mxu0 0
    %994 = vmatpush1.bf16.msra.mxu0 0
    %995 = vmatprep.mubr.bf16.mxu0 0
    %996 = vmatmul.mubr.bf16.gmra.mrb[0].mxu0 %v955
    %v997 = vpop.f32.mrb[0].mxu0
    %v998 = vadd.f32 0.0, %v997
    %v999 = vpop.f32.mrb[0].mxu0
    %v1000 = vpop.f32.mrb[0].mxu0
    %v1001 = vadd.f32 0.0, %v1000
    %v1002 = vpop.f32.mrb[0].mxu0
    %1003 = vmatprep.mubr.bf16.mxu0 0
    %1004 = vmatmul.mubr.bf16.gmra.mrb[0].mxu0 %v958
    %v1005 = vpop.f32.mrb[0].mxu0
    %v1006 = vadd.f32 0.0, %v1005
    %v1007 = vpop.f32.mrb[0].mxu0
    %v1008 = vpop.f32.mrb[0].mxu0
    %v1009 = vadd.f32 0.0, %v1008
    %v1010 = vpop.f32.mrb[0].mxu0
    %1011 = vmatprep.mubr.bf16.mxu0 0
    %1012 = vmatmul.mubr.bf16.gmra.mrb[0].mxu0 %v961
    %v1013 = vpop.f32.mrb[0].mxu0
    %v1014 = vadd.f32 0.0, %v1013
    %v1015 = vpop.f32.mrb[0].mxu0
    %v1016 = vpop.f32.mrb[0].mxu0
    %v1017 = vpop.f32.mrb[0].mxu0
    %1018 = vdwg.mxu0
    %1024 = vrot.lane.b32.xlu0 %v998, 96
    %v1025 = vpop.permute.xlu0 %1024
    %1026 = vrot.lane.b32.xlu0 %v1001, 96
    %v1027 = vpop.permute.xlu0 %1026
    %1028 = vrot.lane.b32.xlu0 %v1006, 96
    %v1029 = vpop.permute.xlu0 %1028
    %1030 = vrot.lane.b32.xlu0 %v1009, 96
    %v1031 = vpop.permute.xlu0 %1030
    %1032 = vrot.lane.b32.xlu0 %v1014, 96
    %v1033 = vpop.permute.xlu0 %1032
    %1039 = vrot.lane.b32.xlu0 %v998, 64
    %v1040 = vpop.permute.xlu0 %1039
    %1041 = vrot.lane.b32.xlu0 %v1001, 64
    %v1042 = vpop.permute.xlu0 %1041
    %1043 = vrot.lane.b32.xlu0 %v1006, 64
    %v1044 = vpop.permute.xlu0 %1043
    %1045 = vrot.lane.b32.xlu0 %v1009, 64
    %v1046 = vpop.permute.xlu0 %1045
    %1047 = vrot.lane.b32.xlu0 %v1014, 64
    %v1048 = vpop.permute.xlu0 %1047
    %1054 = vrot.lane.b32.xlu0 %v998, 32
    %v1055 = vpop.permute.xlu0 %1054
    %1056 = vrot.lane.b32.xlu0 %v1001, 32
    %v1057 = vpop.permute.xlu0 %1056
    %1058 = vrot.lane.b32.xlu0 %v1006, 32
    %v1059 = vpop.permute.xlu0 %1058
    %1060 = vrot.lane.b32.xlu0 %v1009, 32
    %v1061 = vpop.permute.xlu0 %1060
    %1062 = vrot.lane.b32.xlu0 %v1014, 32
    %v1063 = vpop.permute.xlu0 %1062
    %v1069 = vld [vmem:[%s15] sm:$0xff]
    %v1070 = vld [vmem:[%s15 + $0x8] sm:$0xff]
    %v1071 = vld [vmem:[%s15 + $0x10] sm:$0xff]
    %v1072 = vld [vmem:[%s15 + $0x18] sm:$0xff]
    %v1073 = vpack.c.bf16 %v998, %v950
    %v1074 = vpack.c.bf16 %v1006, %v1001
    %v1075 = vpack.c.bf16 %v1014, %v1009
    %v1076 = vpack.c.bf16 %v1027, %v1025
    %v1077 = vpack.c.bf16 %v1031, %v1029
    %v1078 = vpack.c.bf16 %v1040, %v1033
    %v1079 = vpack.c.bf16 %v1044, %v1042
    %v1080 = vpack.c.bf16 %v1048, %v1046
    %v1081 = vpack.c.bf16 %v1057, %v1055
    %v1082 = vpack.c.bf16 %v1061, %v1059
    %v1083 = vpack.c.bf16 %v1063, %v1063
    %v1084 = vld [vmem:[%s16] sm:$0xff]
    %v1085 = vld [vmem:[%s16 + $0x8] sm:$0xff]
    %v1086 = vld [vmem:[%s16 + $0x10] sm:$0xff]
    %v1087 = vld [vmem:[%s16 + $0x18] sm:$0xff]
    %1089 = vset.pattern.permute.xlu0 0
    %1090 = vperm.xlu0 %1089, %v1084
    %v1091 = vpop.permute.xlu0 %1090
    %1094 = vset.pattern.permute.xlu0 0
    %1095 = vperm.xlu0 %1094, %v1085
    %v1096 = vpop.permute.xlu0 %1095
    %1099 = vset.pattern.permute.xlu0 0
    %1100 = vperm.xlu0 %1099, %v1086
    %v1101 = vpop.permute.xlu0 %1100
    %1104 = vset.pattern.permute.xlu0 0
    %1105 = vperm.xlu0 %1104, %v1087
    %v1106 = vpop.permute.xlu0 %1105
    %v1112 = vunpack.c.l.b16 %v1069
    %v1113 = vunpack.c.h.b16 %v1069
    %v1114 = vunpack.c.l.b16 %v1070
    %v1115 = vunpack.c.h.b16 %v1070
    %v1116 = vunpack.c.l.b16 %v1071
    %v1117 = vunpack.c.h.b16 %v1071
    %v1118 = vunpack.c.l.b16 %v1072
    %v1119 = vunpack.c.h.b16 %v1072
    %v1120 = vpack.c.b16 %v1114, %v1112
    %v1121 = vpack.c.b16 %v1115, %v1113
    %v1122 = vpack.c.b16 %v1118, %v1116
    %v1123 = vpack.c.b16 %v1119, %v1117
    %v1127 = vsel %vm818, %v1121, 0
    %v1130 = vsel %vm818, %v1123, 0
    %v1133 = vsel %vm142, %v1083, 0
    %1135 = vmatprep.subr.bf16.mxu0 0
    %1136 = vmatpush1.bf16.msra.mxu0 %v951
    %1137 = vmatprep.subr.bf16.mxu0 0
    %1138 = vmatpush1.bf16.msra.mxu0 %v952
    %1139 = vmatprep.subr.bf16.mxu0 0
    %1140 = vmatpush1.bf16.msra.mxu0 %v1073
    %1141 = vmatprep.subr.bf16.mxu0 0
    %1142 = vmatpush1.bf16.msra.mxu0 %v1074
    %1143 = vmatprep.subr.bf16.mxu0 0
    %1144 = vmatpush1.bf16.msra.mxu0 %v1075
    %1145 = vmatprep.subr.bf16.mxu0 0
    %1146 = vmatpush1.bf16.msra.mxu0 %v1076
    %1147 = vmatprep.subr.bf16.mxu0 0
    %1148 = vmatpush1.bf16.msra.mxu0 %v1077
    %1149 = vmatprep.subr.bf16.mxu0 0
    %1150 = vmatpush1.bf16.msra.mxu0 %v1078
    %1151 = vmatprep.subr.bf16.mxu0 0
    %1152 = vmatpush1.bf16.msra.mxu0 %v1079
    %1153 = vmatprep.subr.bf16.mxu0 0
    %1154 = vmatpush1.bf16.msra.mxu0 %v1080
    %1155 = vmatprep.subr.bf16.mxu0 0
    %1156 = vmatpush1.bf16.msra.mxu0 %v1081
    %1157 = vmatprep.subr.bf16.mxu0 0
    %1158 = vmatpush1.bf16.msra.mxu0 %v1082
    %1159 = vmatprep.subr.bf16.mxu0 0
    %1160 = vmatpush1.bf16.msra.mxu0 %v1133
    %1161 = vmatprep.subr.bf16.mxu0 0
    %1162 = vmatpush1.bf16.msra.mxu0 0
    %1163 = vmatprep.subr.bf16.mxu0 0
    %1164 = vmatpush1.bf16.msra.mxu0 0
    %1165 = vmatprep.subr.bf16.mxu0 0
    %1166 = vmatpush1.bf16.msra.mxu0 0
    %1167 = vmatprep.mubr.bf16.mxu0 %v1127
    %1168 = vmatmul.mubr.bf16.gmra.mrb[0].mxu0 %v1120
    %v1169 = vpop.f32.mrb[0].mxu0
    %v1170 = vadd.f32 %v1091, %v1169
    %v1171 = vpop.f32.mrb[0].mxu0
    %v1172 = vpop.f32.mrb[0].mxu0
    %v1173 = vadd.f32 %v1096, %v1172
    %v1174 = vpop.f32.mrb[0].mxu0
    %1175 = vmatprep.mubr.bf16.mxu0 %v1130
    %1176 = vmatmul.mubr.bf16.gmra.mrb[0].mxu0 %v1122
    %v1177 = vpop.f32.mrb[0].mxu0
    %v1178 = vadd.f32 %v1101, %v1177
    %v1179 = vpop.f32.mrb[0].mxu0
    %v1180 = vpop.f32.mrb[0].mxu0
    %v1181 = vadd.f32 %v1106, %v1180
    %v1182 = vpop.f32.mrb[0].mxu0
    %1183 = vdwg.mxu0
    %v1184 = vtanh.pop %v1170
    %v1185 = vtanh.pop %v1173
    %v1186 = vtanh.pop %v1178
    %v1187 = vtanh.pop %v1181
    %v1188 = vmul.f32 %v940, %v72
    %v1189 = vmul.f32 %v942, %v73
    %v1190 = vmul.f32 %v944, %v74
    %v1191 = vmul.f32 %v946, %v75
    %v1192 = vsub.f32 1.0, %v940
    %v1193 = vsub.f32 1.0, %v942
    %v1194 = vsub.f32 1.0, %v944
    %v1195 = vsub.f32 1.0, %v946
    %v1196 = vmul.f32 %v1192, %v1184
    %v1197 = vmul.f32 %v1193, %v1185
    %v1198 = vmul.f32 %v1194, %v1186
    %v1199 = vmul.f32 %v1195, %v1187
    %v1200 = vadd.f32 %v1188, %v1196
    %v1201 = vadd.f32 %v1189, %v1197
    %v1202 = vadd.f32 %v1190, %v1198
    %v1203 = vadd.f32 %v1191, %v1199
    %v1204 = vsel %vm142, %v587, %v136
    %s1205 = scalar_lea.vmem %s17, %s76
    %1206 = vst.msk [vmem:[%s1205] sm:$0xff] %vm61, %v1204
    %s1207 = smul.u32 %s67, 64
    %s1208 = scalar_lea.vmem %s18, %s1207
    %1209 = vst.msk [vmem:[%s1208] sm:$0xff] %vm61, %v536
    %1210 = vst.msk [vmem:[%s1208 + $0x8] sm:$0xff] %vm61, %v537
    %1211 = vst.msk [vmem:[%s1208 + $0x10] sm:$0xff] %vm61, %v538
    %1212 = vst.msk [vmem:[%s1208 + $0x18] sm:$0xff] %vm61, %v539
    %1213 = vst.msk [vmem:[%s1208 + $0x20] sm:$0xff] %vm61, %v72
    %1214 = vst.msk [vmem:[%s1208 + $0x28] sm:$0xff] %vm61, %v73
    %1215 = vst.msk [vmem:[%s1208 + $0x30] sm:$0xff] %vm61, %v74
    %1216 = vst.msk [vmem:[%s1208 + $0x38] sm:$0xff] %vm61, %v75
    %s1217 = smul.u32 %s67, 32
    %s1218 = scalar_lea.vmem %s19, %s1217
    %1219 = vst.msk [vmem:[%s1218] sm:$0xff] %vm61, %v1200
    %1220 = vst.msk [vmem:[%s1218 + $0x8] sm:$0xff] %vm61, %v1201
    %1221 = vst.msk [vmem:[%s1218 + $0x10] sm:$0xff] %vm61, %v1202
    %1222 = vst.msk [vmem:[%s1218 + $0x18] sm:$0xff] %vm61, %v1203
    %1223 = vst.msk [vmem:[#allocation2] sm:$0xff] %vm61, %v1200
    %1224 = vst.msk [vmem:[#allocation2 + $0x8] sm:$0xff] %vm61, %v1201
    %1225 = vst.msk [vmem:[#allocation2 + $0x10] sm:$0xff] %vm61, %v1202
    %1226 = vst.msk [vmem:[#allocation2 + $0x18] sm:$0xff] %vm61, %v1203
  $region74: #{gril_forward.1} parent=0 // loop_footer
    %s71 = sadd.s32 1, %s67
  $region75: #{gril_forward.1} parent=0 // loop_footer_branch
    %66 = sbr.rel target = $region71
  $region76: #{gril_forward.1} parent=0 // loop_exit
    _
  // Predicated region
  $region77: #{gril_forward.1} parent=0 // pred_check
    _
  $region78: #{gril_forward.1} parent=0 // pred_check_branch
    %1228 = sbr.rel (0) target = $region80
  $region79: #{gril_forward.1} parent=0 // pred_region
    _
  $region80: #{gril_forward.1} parent=0 // pred_fallthru
    _
  // Predicated region
  $region81: #{gril_forward.1} parent=0 // pred_check
    _
  $region82: #{gril_forward.1} parent=0 // pred_check_branch
    %1230 = sbr.rel (0) target = $region84
  $region83: #{gril_forward.1} parent=0 // pred_region
    _
  $region84: #{gril_forward.1} parent=0 // pred_fallthru
    _
  // Predicated region
  $region85: #{gril_forward.1} parent=0 // pred_check
    _
  $region86: #{gril_forward.1} parent=0 // pred_check_branch
    %1232 = sbr.rel (0) target = $region88
  $region87: #{gril_forward.1} parent=0 // pred_region
    _
  $region88: #{gril_forward.1} parent=0 // pred_fallthru
    _
  // Predicated region
  $region89: #{gril_forward.1} parent=0 // pred_check
    _
  $region90: #{gril_forward.1} parent=0 // pred_check_branch
    %1234 = sbr.rel (0) target = $region92
  $region91: #{gril_forward.1} parent=0 // pred_region
    _
  $region92: #{gril_forward.1} parent=0 // pred_fallthru
    _
  // Predicated region
  $region93: #{gril_forward.1} parent=0 // pred_check
    _
  $region94: #{gril_forward.1} parent=0 // pred_check_branch
    %1236 = sbr.rel (0) target = $region96
  $region95: #{gril_forward.1} parent=0 // pred_region
    _
  $region96: #{gril_forward.1} parent=0 // pred_fallthru
    _
  // Predicated region
  $region97: #{gril_forward.1} parent=0 // pred_check
    _
  $region98: #{gril_forward.1} parent=0 // pred_check_branch
    %1238 = sbr.rel (0) target = $region100
  $region99: #{gril_forward.1} parent=0 // pred_region
    _
  $region100: #{gril_forward.1} parent=0 // pred_fallthru
    _

</llo_original>
